<compile_context>
chip_gen: v6e
topology: v6e:2x2x1
jax: 0.10.0
libtpu: 0.0.40
codegen_flags: <defaults>
</compile_context>

<pallas_src>
import functools

import jax
import jax.numpy as jnp
from jax.experimental import pallas as pl
from jax.experimental.pallas import tpu as pltpu


def _inverted_residual_kernel(x_ref, w1_ref, b12_ref, wd_ref, mask_ref, w3_ref,
                              b3_ref, *rest, H, W, stride, is_residual):
    """Fused InvertedResidual forward for one batch element.

    Layout: channels on sublanes, flattened spatial (H*W) on the lane axis.

    x_ref   : [1, C_in, H*W]    input activations (bf16)
    w1_ref  : [C_exp, C_in]     1x1 expand weight, BN1 scale folded in (bf16)
    b12_ref : [C_exp, 2]        folded BN1 / BN2 biases (f32)
    wd_ref  : [C_exp, 9]        3x3 depthwise weights (tap-minor), BN2 scale folded (f32)
    mask_ref: [9, H*W]          1.0 where tap (dy,dx) stays inside the image, else 0.0
    w3_ref  : [C_out, C_exp]    1x1 project weight, BN3 scale folded in (bf16)
    b3_ref  : [C_out, 1]        folded BN3 bias (f32)
    sel_ref : [H*W, Ho*Wo]      (only when stride > 1) 0/1 subsampling matrix
    o_ref   : [1, C_out, Ho*Wo]
    """
    if stride == 1:
        (o_ref,) = rest
        sel_ref = None
    else:
        sel_ref, o_ref = rest
    HW = H * W

    # ---- 1x1 expand conv (bf16 MXU, f32 accumulate) + BN1 bias + ReLU6 -----
    x = x_ref[0]                                               # [C_in, HW] bf16
    xe = jnp.dot(w1_ref[...], x, preferred_element_type=jnp.float32)
    xe = jnp.clip(xe + b12_ref[:, 0:1], 0.0, 6.0)              # [C_exp, HW] f32

    # ---- 3x3 depthwise conv (stride 1, pad 1), VPU ------------------------
    # Each tap is a static cyclic shift of the flat spatial axis; entries that
    # crossed a row / image edge (incl. cyclic wrap) are zeroed by the mask row.
    acc = xe * wd_ref[:, 4:5]                                  # center tap
    taps = tuple((dy, dx) for dy in (-1, 0, 1) for dx in (-1, 0, 1))
    for t, (dy, dx) in enumerate(taps):
        if dy == 0 and dx == 0:
            continue
        s = (dy * W + dx) % HW                                 # static left shift
        tap = jnp.concatenate([xe[:, s:], xe[:, :s]], axis=1)  # tap[:,p]=xe[:,p+dy*W+dx]
        acc = acc + (tap * mask_ref[t:t + 1, :]) * wd_ref[:, t:t + 1]

    # ---- stride > 1: subsample the stride-1 result on the MXU (exact) ------
    if stride > 1:
        acc = jnp.dot(acc, sel_ref[...], preferred_element_type=jnp.float32)

    y = jnp.clip(acc + b12_ref[:, 1:2], 0.0, 6.0)              # [C_exp, Ho*Wo]

    # ---- 1x1 project conv (bf16 MXU) + BN3 bias (no activation) ------------
    z = jnp.dot(w3_ref[...], y.astype(jnp.bfloat16),
                preferred_element_type=jnp.float32)
    z = z + b3_ref[...]                                        # [C_out, Ho*Wo]

    if is_residual:
        # Late re-read keeps x's live range short; residual add stays in f32.
        z = z + x_ref[0].astype(jnp.float32)

    o_ref[0] = z.astype(o_ref.dtype)


def _fold_bn(gamma, beta, mean, var, eps=1e-5):
    scale = gamma / jnp.sqrt(var + eps)
    return scale, beta - mean * scale


def inverted_residual_forward(x_nchw, params, *, stride=1, eps=1e-5):
    """Pallas equivalent of InvertedResidual.forward (inference-mode BN)."""
    N, C_in, H, W = x_nchw.shape
    C_exp = params["w1"].shape[1]
    C_out = params["w3"].shape[1]
    is_residual = (stride == 1) and (C_in == C_out)
    H_out = (H - 1) // stride + 1
    W_out = (W - 1) // stride + 1
    HW, HWo = H * W, H_out * W_out

    # Channels on sublanes, flat spatial on lanes: NCHW only needs a reshape.
    # bf16 stream halves activation DMA bytes; MXU accumulates in f32.
    x = x_nchw.reshape(N, C_in, HW).astype(jnp.bfloat16)

    s1, t1 = _fold_bn(params["g1"], params["b1"], params["m1"], params["v1"], eps)
    s2, t2 = _fold_bn(params["g2"], params["b2"], params["m2"], params["v2"], eps)
    s3, t3 = _fold_bn(params["g3"], params["b3"], params["m3"], params["v3"], eps)

    # Fold BN scales into the conv weights (exact for inference BN); only the
    # biases go to the kernel (b1/b2 packed into one [C_exp, 2] operand).
    w1k = (params["w1"] * s1[None, :]).T.astype(jnp.bfloat16)           # [C_exp, C_in]
    wdk = (params["wd"].reshape(9, C_exp) * s2[None, :]).T.astype(jnp.float32)  # [C_exp, 9]
    w3k = (params["w3"] * s3[None, :]).T.astype(jnp.bfloat16)           # [C_out, C_exp]
    b12k = jnp.stack([t1, t2], axis=1).astype(jnp.float32)              # [C_exp, 2]
    b3k = t3.reshape(C_out, 1).astype(jnp.float32)                      # [C_out, 1]

    # Border-validity masks for the 9 depthwise taps (padding=1) in flat layout.
    yy = jnp.arange(H)[:, None]
    xx = jnp.arange(W)[None, :]
    rows = []
    for dy in (-1, 0, 1):
        for dx in (-1, 0, 1):
            ok = (yy + dy >= 0) & (yy + dy < H) & (xx + dx >= 0) & (xx + dx < W)
            rows.append(ok.reshape(HW))
    masks = jnp.stack(rows).astype(jnp.float32)                         # [9, HW]

    operands = [x, w1k, b12k, wdk, masks, w3k, b3k]
    in_specs = [pl.BlockSpec((1, C_in, HW), lambda n: (n, 0, 0))]
    in_specs += [pl.BlockSpec(a.shape, lambda n: (0, 0)) for a in operands[1:]]

    if stride > 1:
        # Strided depthwise == stride-1 depthwise subsampled at (s*yo, s*xo);
        # a 0/1 selection matmul avoids strided lane gathers and is exact.
        src = (stride * (jnp.arange(HWo) // W_out)) * W \
            + stride * (jnp.arange(HWo) % W_out)                        # [HWo]
        sel = (jnp.arange(HW)[:, None] == src[None, :]).astype(jnp.float32)
        operands.append(sel)
        in_specs.append(pl.BlockSpec(sel.shape, lambda n: (0, 0)))

    kernel = functools.partial(_inverted_residual_kernel, H=H, W=W,
                               stride=stride, is_residual=is_residual)

    out = pl.pallas_call(
        kernel,
        out_shape=jax.ShapeDtypeStruct((N, C_out, HWo), x_nchw.dtype),
        grid=(N,),
        in_specs=in_specs,
        out_specs=pl.BlockSpec((1, C_out, HWo), lambda n: (n, 0, 0)),
        compiler_params=pltpu.CompilerParams(
            dimension_semantics=("parallel",),
            vmem_limit_bytes=32 * 1024 * 1024),
    )(*operands)

    return out.reshape(N, C_out, H_out, W_out)                          # NCHW


def make_params(key, c_in, c_out, expansion):
    c_exp = c_in * expansion
    ks = iter(jax.random.split(key, 16))

    def bn_params(c):
        return (1.0 + 0.1 * jax.random.normal(next(ks), (c,), jnp.float32),
                0.1 * jax.random.normal(next(ks), (c,), jnp.float32),
                0.1 * jax.random.normal(next(ks), (c,), jnp.float32),
                jax.random.uniform(next(ks), (c,), jnp.float32, 0.5, 1.5))

    g1, b1, m1, v1 = bn_params(c_exp)
    g2, b2, m2, v2 = bn_params(c_exp)
    g3, b3, m3, v3 = bn_params(c_out)
    return dict(
        w1=0.3 * jax.random.normal(next(ks), (c_in, c_exp), jnp.float32),
        wd=0.3 * jax.random.normal(next(ks), (3, 3, c_exp), jnp.float32),
        w3=0.3 * jax.random.normal(next(ks), (c_exp, c_out), jnp.float32),
        g1=g1, b1=b1, m1=m1, v1=v1,
        g2=g2, b2=b2, m2=m2, v2=v2,
        g3=g3, b3=b3, m3=m3, v3=v3,
    )


def _reference_inverted_residual(x_nchw, p, *, stride, eps=1e-5):
    """Pure-JAX reference matching the torch module (inference-mode BN)."""
    x = jnp.transpose(x_nchw, (0, 2, 3, 1)).astype(jnp.float32)   # NHWC
    c_in = x.shape[-1]
    c_exp = p["w1"].shape[1]
    c_out = p["w3"].shape[1]
    dn = ("NHWC", "HWIO", "NHWC")
    hp = jax.lax.Precision.HIGHEST

    def bn(y, g, b, m, v):
        return (y - m) * (g / jnp.sqrt(v + eps)) + b

    y = jax.lax.conv_general_dilated(
        x, p["w1"].reshape(1, 1, c_in, c_exp), (1, 1), "VALID",
        dimension_numbers=dn, precision=hp)
    y = jnp.clip(bn(y, p["g1"], p["b1"], p["m1"], p["v1"]), 0.0, 6.0)

    y = jax.lax.conv_general_dilated(
        y, p["wd"].reshape(3, 3, 1, c_exp), (stride, stride),
        ((1, 1), (1, 1)), dimension_numbers=dn,
        feature_group_count=c_exp, precision=hp)
    y = jnp.clip(bn(y, p["g2"], p["b2"], p["m2"], p["v2"]), 0.0, 6.0)

    y = jax.lax.conv_general_dilated(
        y, p["w3"].reshape(1, 1, c_exp, c_out), (1, 1), "VALID",
        dimension_numbers=dn, precision=hp)
    y = bn(y, p["g3"], p["b3"], p["m3"], p["v3"])

    if stride == 1 and c_in == c_out:
        y = y + x
    return jnp.transpose(y, (0, 3, 1, 2))


if __name__ == "__main__":
    key = jax.random.PRNGKey(0)
    k_x, k_p, k_p2 = jax.random.split(key, 3)

    # Residual config: batch=2, C_in=C_out=8, expansion=6, 16x16, stride=1.
    N, C_in, H, W = 2, 8, 16, 16
    expansion, C_out, stride = 6, 8, 1

    x = jax.random.normal(k_x, (N, C_in, H, W), dtype=jnp.float32)
    params = make_params(k_p, C_in, C_out, expansion)

    out = jax.block_until_ready(inverted_residual_forward(x, params, stride=stride))
    ref = _reference_inverted_residual(x, params, stride=stride)
    assert out.shape == ref.shape, (out.shape, ref.shape)
    # bf16 MXU operands vs. an all-f32 HIGHEST-precision reference -> ~1e-2 diffs.
    max_err = float(jnp.max(jnp.abs(out - ref)))
    assert max_err < 1e-1, f"stride-1 max abs error vs reference: {max_err}"

    # Non-residual, strided config: stride=2, C_out=16.
    C_out2, stride2 = 16, 2
    params2 = make_params(k_p2, C_in, C_out2, expansion)
    out2 = jax.block_until_ready(inverted_residual_forward(x, params2, stride=stride2))
    ref2 = _reference_inverted_residual(x, params2, stride=stride2)
    assert out2.shape == ref2.shape, (out2.shape, ref2.shape)
    max_err2 = float(jnp.max(jnp.abs(out2 - ref2)))
    assert max_err2 < 1e-1, f"stride-2 max abs error vs reference: {max_err2}"

    print("KERNEL_OK")
</pallas_src>

<mosaic_0001>
module attributes {stable_mosaic.version = 11 : i64} {
  func.func @_inverted_residual_kernel(%arg0: i32, %arg1: memref<1x8x256xbf16, #tpu.memory_space<vmem>>, %arg2: memref<48x8xbf16, #tpu.memory_space<vmem>>, %arg3: memref<48x2xf32, #tpu.memory_space<vmem>>, %arg4: memref<48x9xf32, #tpu.memory_space<vmem>>, %arg5: memref<9x256xf32, #tpu.memory_space<vmem>>, %arg6: memref<8x48xbf16, #tpu.memory_space<vmem>>, %arg7: memref<8x1xf32, #tpu.memory_space<vmem>>, %arg8: memref<1x8x256xf32, #tpu.memory_space<vmem>>) attributes {dimension_semantics = [#tpu.dimension_semantics<parallel>], iteration_bounds = array<i64: 2>, scalar_prefetch = 0 : i64, scratch_operands = 0 : i64, tpu.core_type = #tpu.core_type<tc>, window_params = [{transform_indices = @transform_0, window_bounds = array<i64: 1, 8, 256>}, {pipeline_mode = #tpu.pipeline_mode<synchronous>, transform_indices = @transform_1, window_bounds = array<i64: 48, 8>}, {pipeline_mode = #tpu.pipeline_mode<synchronous>, transform_indices = @transform_2, window_bounds = array<i64: 48, 2>}, {pipeline_mode = #tpu.pipeline_mode<synchronous>, transform_indices = @transform_3, window_bounds = array<i64: 48, 9>}, {pipeline_mode = #tpu.pipeline_mode<synchronous>, transform_indices = @transform_4, window_bounds = array<i64: 9, 256>}, {pipeline_mode = #tpu.pipeline_mode<synchronous>, transform_indices = @transform_5, window_bounds = array<i64: 8, 48>}, {pipeline_mode = #tpu.pipeline_mode<synchronous>, transform_indices = @transform_6, window_bounds = array<i64: 8, 1>}, {transform_indices = @transform_7, window_bounds = array<i64: 1, 8, 256>}]} {
    %c0 = arith.constant 0 : index
    %c0_0 = arith.constant 0 : index
    %c0_1 = arith.constant 0 : index
    %0 = vector.load %arg1[%c0, %c0_0, %c0_1] : memref<1x8x256xbf16, #tpu.memory_space<vmem>>, vector<1x8x256xbf16>
    %1 = vector.shape_cast %0 : vector<1x8x256xbf16> to vector<8x256xbf16>
    %c0_2 = arith.constant 0 : index
    %c0_3 = arith.constant 0 : index
    %2 = vector.load %arg2[%c0_2, %c0_3] : memref<48x8xbf16, #tpu.memory_space<vmem>>, vector<48x8xbf16>
    %cst = arith.constant dense<0.000000e+00> : vector<48x256xf32>
    %3 = tpu.matmul %2, %1, %cst {dimension_numbers = #tpu.dot_dimension_numbers<[1], [0], [0], [1], [0, 0, 1, 1], [], []>} : vector<48x8xbf16>, vector<8x256xbf16>, vector<48x256xf32> -> vector<48x256xf32>
    %c0_4 = arith.constant 0 : index
    %c0_5 = arith.constant 0 : index
    %4 = vector.load %arg3[%c0_4, %c0_5] : memref<48x2xf32, #tpu.memory_space<vmem>>, vector<48x1xf32>
    %5 = vector.broadcast %4 : vector<48x1xf32> to vector<48x256xf32>
    %6 = arith.addf %3, %5 : vector<48x256xf32>
    %cst_6 = arith.constant 0.000000e+00 : f32
    %cst_7 = arith.constant 6.000000e+00 : f32
    %7 = vector.broadcast %cst_6 : f32 to vector<48x256xf32>
    %8 = arith.maximumf %7, %6 : vector<48x256xf32>
    %9 = vector.broadcast %cst_7 : f32 to vector<48x256xf32>
    %10 = arith.minimumf %9, %8 : vector<48x256xf32>
    %c0_8 = arith.constant 0 : index
    %c4 = arith.constant 4 : index
    %11 = vector.load %arg4[%c0_8, %c4] : memref<48x9xf32, #tpu.memory_space<vmem>>, vector<48x1xf32>
    %12 = vector.broadcast %11 : vector<48x1xf32> to vector<48x256xf32>
    %13 = arith.mulf %10, %12 : vector<48x256xf32>
    %14 = vector.extract_strided_slice %10 {offsets = [0, 239], sizes = [48, 17], strides = [1, 1]} : vector<48x256xf32> to vector<48x17xf32>
    %15 = vector.extract_strided_slice %10 {offsets = [0, 0], sizes = [48, 239], strides = [1, 1]} : vector<48x256xf32> to vector<48x239xf32>
    %16 = tpu.concatenate %14, %15 in 1 : vector<48x17xf32>, vector<48x239xf32> -> vector<48x256xf32>
    %c0_9 = arith.constant 0 : index
    %c0_10 = arith.constant 0 : index
    %17 = vector.load %arg5[%c0_9, %c0_10] : memref<9x256xf32, #tpu.memory_space<vmem>>, vector<1x256xf32>
    %18 = vector.broadcast %17 : vector<1x256xf32> to vector<48x256xf32>
    %19 = arith.mulf %16, %18 : vector<48x256xf32>
    %c0_11 = arith.constant 0 : index
    %c0_12 = arith.constant 0 : index
    %20 = vector.load %arg4[%c0_11, %c0_12] : memref<48x9xf32, #tpu.memory_space<vmem>>, vector<48x1xf32>
    %21 = vector.broadcast %20 : vector<48x1xf32> to vector<48x256xf32>
    %22 = arith.mulf %19, %21 : vector<48x256xf32>
    %23 = arith.addf %13, %22 : vector<48x256xf32>
    %24 = vector.extract_strided_slice %10 {offsets = [0, 240], sizes = [48, 16], strides = [1, 1]} : vector<48x256xf32> to vector<48x16xf32>
    %25 = vector.extract_strided_slice %10 {offsets = [0, 0], sizes = [48, 240], strides = [1, 1]} : vector<48x256xf32> to vector<48x240xf32>
    %26 = tpu.concatenate %24, %25 in 1 : vector<48x16xf32>, vector<48x240xf32> -> vector<48x256xf32>
    %c1 = arith.constant 1 : index
    %c0_13 = arith.constant 0 : index
    %27 = vector.load %arg5[%c1, %c0_13] : memref<9x256xf32, #tpu.memory_space<vmem>>, vector<1x256xf32>
    %28 = vector.broadcast %27 : vector<1x256xf32> to vector<48x256xf32>
    %29 = arith.mulf %26, %28 : vector<48x256xf32>
    %c0_14 = arith.constant 0 : index
    %c1_15 = arith.constant 1 : index
    %30 = vector.load %arg4[%c0_14, %c1_15] : memref<48x9xf32, #tpu.memory_space<vmem>>, vector<48x1xf32>
    %31 = vector.broadcast %30 : vector<48x1xf32> to vector<48x256xf32>
    %32 = arith.mulf %29, %31 : vector<48x256xf32>
    %33 = arith.addf %23, %32 : vector<48x256xf32>
    %34 = vector.extract_strided_slice %10 {offsets = [0, 241], sizes = [48, 15], strides = [1, 1]} : vector<48x256xf32> to vector<48x15xf32>
    %35 = vector.extract_strided_slice %10 {offsets = [0, 0], sizes = [48, 241], strides = [1, 1]} : vector<48x256xf32> to vector<48x241xf32>
    %36 = tpu.concatenate %34, %35 in 1 : vector<48x15xf32>, vector<48x241xf32> -> vector<48x256xf32>
    %c2 = arith.constant 2 : index
    %c0_16 = arith.constant 0 : index
    %37 = vector.load %arg5[%c2, %c0_16] : memref<9x256xf32, #tpu.memory_space<vmem>>, vector<1x256xf32>
    %38 = vector.broadcast %37 : vector<1x256xf32> to vector<48x256xf32>
    %39 = arith.mulf %36, %38 : vector<48x256xf32>
    %c0_17 = arith.constant 0 : index
    %c2_18 = arith.constant 2 : index
    %40 = vector.load %arg4[%c0_17, %c2_18] : memref<48x9xf32, #tpu.memory_space<vmem>>, vector<48x1xf32>
    %41 = vector.broadcast %40 : vector<48x1xf32> to vector<48x256xf32>
    %42 = arith.mulf %39, %41 : vector<48x256xf32>
    %43 = arith.addf %33, %42 : vector<48x256xf32>
    %44 = vector.extract_strided_slice %10 {offsets = [0, 255], sizes = [48, 1], strides = [1, 1]} : vector<48x256xf32> to vector<48x1xf32>
    %45 = vector.extract_strided_slice %10 {offsets = [0, 0], sizes = [48, 255], strides = [1, 1]} : vector<48x256xf32> to vector<48x255xf32>
    %46 = tpu.concatenate %44, %45 in 1 : vector<48x1xf32>, vector<48x255xf32> -> vector<48x256xf32>
    %c3 = arith.constant 3 : index
    %c0_19 = arith.constant 0 : index
    %47 = vector.load %arg5[%c3, %c0_19] : memref<9x256xf32, #tpu.memory_space<vmem>>, vector<1x256xf32>
    %48 = vector.broadcast %47 : vector<1x256xf32> to vector<48x256xf32>
    %49 = arith.mulf %46, %48 : vector<48x256xf32>
    %c0_20 = arith.constant 0 : index
    %c3_21 = arith.constant 3 : index
    %50 = vector.load %arg4[%c0_20, %c3_21] : memref<48x9xf32, #tpu.memory_space<vmem>>, vector<48x1xf32>
    %51 = vector.broadcast %50 : vector<48x1xf32> to vector<48x256xf32>
    %52 = arith.mulf %49, %51 : vector<48x256xf32>
    %53 = arith.addf %43, %52 : vector<48x256xf32>
    %54 = vector.extract_strided_slice %10 {offsets = [0, 1], sizes = [48, 255], strides = [1, 1]} : vector<48x256xf32> to vector<48x255xf32>
    %55 = vector.extract_strided_slice %10 {offsets = [0, 0], sizes = [48, 1], strides = [1, 1]} : vector<48x256xf32> to vector<48x1xf32>
    %56 = tpu.concatenate %54, %55 in 1 : vector<48x255xf32>, vector<48x1xf32> -> vector<48x256xf32>
    %c5 = arith.constant 5 : index
    %c0_22 = arith.constant 0 : index
    %57 = vector.load %arg5[%c5, %c0_22] : memref<9x256xf32, #tpu.memory_space<vmem>>, vector<1x256xf32>
    %58 = vector.broadcast %57 : vector<1x256xf32> to vector<48x256xf32>
    %59 = arith.mulf %56, %58 : vector<48x256xf32>
    %c0_23 = arith.constant 0 : index
    %c5_24 = arith.constant 5 : index
    %60 = vector.load %arg4[%c0_23, %c5_24] : memref<48x9xf32, #tpu.memory_space<vmem>>, vector<48x1xf32>
    %61 = vector.broadcast %60 : vector<48x1xf32> to vector<48x256xf32>
    %62 = arith.mulf %59, %61 : vector<48x256xf32>
    %63 = arith.addf %53, %62 : vector<48x256xf32>
    %64 = vector.extract_strided_slice %10 {offsets = [0, 15], sizes = [48, 241], strides = [1, 1]} : vector<48x256xf32> to vector<48x241xf32>
    %65 = vector.extract_strided_slice %10 {offsets = [0, 0], sizes = [48, 15], strides = [1, 1]} : vector<48x256xf32> to vector<48x15xf32>
    %66 = tpu.concatenate %64, %65 in 1 : vector<48x241xf32>, vector<48x15xf32> -> vector<48x256xf32>
    %c6 = arith.constant 6 : index
    %c0_25 = arith.constant 0 : index
    %67 = vector.load %arg5[%c6, %c0_25] : memref<9x256xf32, #tpu.memory_space<vmem>>, vector<1x256xf32>
    %68 = vector.broadcast %67 : vector<1x256xf32> to vector<48x256xf32>
    %69 = arith.mulf %66, %68 : vector<48x256xf32>
    %c0_26 = arith.constant 0 : index
    %c6_27 = arith.constant 6 : index
    %70 = vector.load %arg4[%c0_26, %c6_27] : memref<48x9xf32, #tpu.memory_space<vmem>>, vector<48x1xf32>
    %71 = vector.broadcast %70 : vector<48x1xf32> to vector<48x256xf32>
    %72 = arith.mulf %69, %71 : vector<48x256xf32>
    %73 = arith.addf %63, %72 : vector<48x256xf32>
    %74 = vector.extract_strided_slice %10 {offsets = [0, 16], sizes = [48, 240], strides = [1, 1]} : vector<48x256xf32> to vector<48x240xf32>
    %75 = vector.extract_strided_slice %10 {offsets = [0, 0], sizes = [48, 16], strides = [1, 1]} : vector<48x256xf32> to vector<48x16xf32>
    %76 = tpu.concatenate %74, %75 in 1 : vector<48x240xf32>, vector<48x16xf32> -> vector<48x256xf32>
    %c7 = arith.constant 7 : index
    %c0_28 = arith.constant 0 : index
    %77 = vector.load %arg5[%c7, %c0_28] : memref<9x256xf32, #tpu.memory_space<vmem>>, vector<1x256xf32>
    %78 = vector.broadcast %77 : vector<1x256xf32> to vector<48x256xf32>
    %79 = arith.mulf %76, %78 : vector<48x256xf32>
    %c0_29 = arith.constant 0 : index
    %c7_30 = arith.constant 7 : index
    %80 = vector.load %arg4[%c0_29, %c7_30] : memref<48x9xf32, #tpu.memory_space<vmem>>, vector<48x1xf32>
    %81 = vector.broadcast %80 : vector<48x1xf32> to vector<48x256xf32>
    %82 = arith.mulf %79, %81 : vector<48x256xf32>
    %83 = arith.addf %73, %82 : vector<48x256xf32>
    %84 = vector.extract_strided_slice %10 {offsets = [0, 17], sizes = [48, 239], strides = [1, 1]} : vector<48x256xf32> to vector<48x239xf32>
    %85 = vector.extract_strided_slice %10 {offsets = [0, 0], sizes = [48, 17], strides = [1, 1]} : vector<48x256xf32> to vector<48x17xf32>
    %86 = tpu.concatenate %84, %85 in 1 : vector<48x239xf32>, vector<48x17xf32> -> vector<48x256xf32>
    %c8 = arith.constant 8 : index
    %c0_31 = arith.constant 0 : index
    %87 = vector.load %arg5[%c8, %c0_31] : memref<9x256xf32, #tpu.memory_space<vmem>>, vector<1x256xf32>
    %88 = vector.broadcast %87 : vector<1x256xf32> to vector<48x256xf32>
    %89 = arith.mulf %86, %88 : vector<48x256xf32>
    %c0_32 = arith.constant 0 : index
    %c8_33 = arith.constant 8 : index
    %90 = vector.load %arg4[%c0_32, %c8_33] : memref<48x9xf32, #tpu.memory_space<vmem>>, vector<48x1xf32>
    %91 = vector.broadcast %90 : vector<48x1xf32> to vector<48x256xf32>
    %92 = arith.mulf %89, %91 : vector<48x256xf32>
    %93 = arith.addf %83, %92 : vector<48x256xf32>
    %c0_34 = arith.constant 0 : index
    %c1_35 = arith.constant 1 : index
    %94 = vector.load %arg3[%c0_34, %c1_35] : memref<48x2xf32, #tpu.memory_space<vmem>>, vector<48x1xf32>
    %95 = vector.broadcast %94 : vector<48x1xf32> to vector<48x256xf32>
    %96 = arith.addf %93, %95 : vector<48x256xf32>
    %cst_36 = arith.constant 0.000000e+00 : f32
    %cst_37 = arith.constant 6.000000e+00 : f32
    %97 = vector.broadcast %cst_36 : f32 to vector<48x256xf32>
    %98 = arith.maximumf %97, %96 : vector<48x256xf32>
    %99 = vector.broadcast %cst_37 : f32 to vector<48x256xf32>
    %100 = arith.minimumf %99, %98 : vector<48x256xf32>
    %c0_38 = arith.constant 0 : index
    %c0_39 = arith.constant 0 : index
    %101 = vector.load %arg6[%c0_38, %c0_39] : memref<8x48xbf16, #tpu.memory_space<vmem>>, vector<8x48xbf16>
    %102 = arith.truncf %100 : vector<48x256xf32> to vector<48x256xbf16>
    %cst_40 = arith.constant dense<0.000000e+00> : vector<8x256xf32>
    %103 = tpu.matmul %101, %102, %cst_40 {dimension_numbers = #tpu.dot_dimension_numbers<[1], [0], [0], [1], [0, 0, 1, 1], [], []>} : vector<8x48xbf16>, vector<48x256xbf16>, vector<8x256xf32> -> vector<8x256xf32>
    %c0_41 = arith.constant 0 : index
    %c0_42 = arith.constant 0 : index
    %104 = vector.load %arg7[%c0_41, %c0_42] : memref<8x1xf32, #tpu.memory_space<vmem>>, vector<8x1xf32>
    %105 = vector.broadcast %104 : vector<8x1xf32> to vector<8x256xf32>
    %106 = arith.addf %103, %105 : vector<8x256xf32>
    %c0_43 = arith.constant 0 : index
    %c0_44 = arith.constant 0 : index
    %c0_45 = arith.constant 0 : index
    %107 = vector.load %arg1[%c0_43, %c0_44, %c0_45] : memref<1x8x256xbf16, #tpu.memory_space<vmem>>, vector<1x8x256xbf16>
    %108 = vector.shape_cast %107 : vector<1x8x256xbf16> to vector<8x256xbf16>
    %109 = arith.extf %108 : vector<8x256xbf16> to vector<8x256xf32>
    %110 = arith.addf %106, %109 : vector<8x256xf32>
    %c0_46 = arith.constant 0 : index
    %c0_47 = arith.constant 0 : index
    %c0_48 = arith.constant 0 : index
    %111 = vector.load %arg8[%c0_46, %c0_47, %c0_48] : memref<1x8x256xf32, #tpu.memory_space<vmem>>, vector<1x8x256xf32>
    %112 = vector.shape_cast %111 : vector<1x8x256xf32> to vector<8x256xf32>
    %113 = vector.shape_cast %110 : vector<8x256xf32> to vector<1x8x256xf32>
    tpu.vector_store %arg8[%c0_46, %c0_47, %c0_48], %113 {strides = array<i32>} : memref<1x8x256xf32, #tpu.memory_space<vmem>>, vector<1x8x256xf32>,
    return
  }
  func.func @transform_0(%arg0: i32) -> (i32, i32, i32) {
    %c0_i32 = arith.constant 0 : i32
    %c0_i32_0 = arith.constant 0 : i32
    %c0_i32_1 = arith.constant 0 : i32
    return %arg0, %c0_i32, %c0_i32_0 : i32, i32, i32
  }
  func.func @transform_1(%arg0: i32) -> (i32, i32) {
    %c0_i32 = arith.constant 0 : i32
    %c0_i32_0 = arith.constant 0 : i32
    %c0_i32_1 = arith.constant 0 : i32
    return %c0_i32, %c0_i32_0 : i32, i32
  }
  func.func @transform_2(%arg0: i32) -> (i32, i32) {
    %c0_i32 = arith.constant 0 : i32
    %c0_i32_0 = arith.constant 0 : i32
    %c0_i32_1 = arith.constant 0 : i32
    return %c0_i32, %c0_i32_0 : i32, i32
  }
  func.func @transform_3(%arg0: i32) -> (i32, i32) {
    %c0_i32 = arith.constant 0 : i32
    %c0_i32_0 = arith.constant 0 : i32
    %c0_i32_1 = arith.constant 0 : i32
    return %c0_i32, %c0_i32_0 : i32, i32
  }
  func.func @transform_4(%arg0: i32) -> (i32, i32) {
    %c0_i32 = arith.constant 0 : i32
    %c0_i32_0 = arith.constant 0 : i32
    %c0_i32_1 = arith.constant 0 : i32
    return %c0_i32, %c0_i32_0 : i32, i32
  }
  func.func @transform_5(%arg0: i32) -> (i32, i32) {
    %c0_i32 = arith.constant 0 : i32
    %c0_i32_0 = arith.constant 0 : i32
    %c0_i32_1 = arith.constant 0 : i32
    return %c0_i32, %c0_i32_0 : i32, i32
  }
  func.func @transform_6(%arg0: i32) -> (i32, i32) {
    %c0_i32 = arith.constant 0 : i32
    %c0_i32_0 = arith.constant 0 : i32
    %c0_i32_1 = arith.constant 0 : i32
    return %c0_i32, %c0_i32_0 : i32, i32
  }
  func.func @transform_7(%arg0: i32) -> (i32, i32, i32) {
    %c0_i32 = arith.constant 0 : i32
    %c0_i32_0 = arith.constant 0 : i32
    %c0_i32_1 = arith.constant 0 : i32
    return %arg0, %c0_i32, %c0_i32_0 : i32, i32, i32
  }
}

</mosaic_0001>

<llo_original>
// kernel: tpu_custom_call.1
$region0: #{tpu_custom_call.1}
  #allocation0 [shape = 'u32[]', space=smem, size = 0x4, offset = 0x4, fixed_abs, tag = 'smem constant byte address 0x4 - core index']
  #allocation1 [shape = 'u32[144,128]{1,0:T(1,128)}', space=vmem, size = 0x12000, scoped, tag = 'internal scratch']
  %s0 = inlined_call_operand.vmem [shape: bf16[2,8,256], index: 0, kind: input, shape index: {}]
  %s1 = inlined_call_operand.vmem [shape: bf16[48,8], index: 1, kind: input, shape index: {}]
  %s2 = inlined_call_operand.vmem [shape: f32[48,2], index: 2, kind: input, shape index: {}]
  %s3 = inlined_call_operand.vmem [shape: f32[48,9], index: 3, kind: input, shape index: {}]
  %s4 = inlined_call_operand.vmem [shape: f32[9,256], index: 4, kind: input, shape index: {}]
  %s5 = inlined_call_operand.vmem [shape: bf16[8,48], index: 5, kind: input, shape index: {}]
  %s6 = inlined_call_operand.vmem [shape: f32[8,1], index: 6, kind: input, shape index: {}]
  %s7 = inlined_call_operand.hbm [shape: f32[2,8,256], index: 7, kind: output, shape index: {}]
  %s8 = sld [smem:[#allocation0]]
  $region61: #{tpu_custom_call.1} parent=0
    _
  %s10 = ssub.s32 1, %s8
  %s11 = scalar_select 0, %s10, %s8
  $region1: #{tpu_custom_call.1} parent=0
    #allocation2 [shape = 'u8[16384]{0}', space=vmem, size = 0x4000, scoped, tag = 'output window, operand 0']
    #allocation3 [shape = 's32[2]{0}', space=sflag, size = 0x8, scoped, tag = 'scoped memory for tpu_custom_call.1']
    %12 = vsyncpa [#allocation3], 0
    %s13 = scalar_lea.sflag [#allocation3], 1
    %14 = vsyncpa %s13, 0
    loop: start=0, step=1, limit=4
    $region2: #{tpu_custom_call.1} parent=1 // loop_pre_header
      _
    $region3: #{tpu_custom_call.1} parent=1 // loop_header
      %s16 = sphi 0, %s20
      %p17 = scmp.ge.s32.totalorder %s16, 4
      %s26 = sphi 0, %s28
      %s29 = sphi 0, %s26
      %s30 = sphi 0, %s29
      %s46 = sphi 0, %s30
      %s50 = sphi 0, %s50
      %s52 = sphi 0, %s50
      %s53 = sphi 0, %s52
      %s67 = sphi 0, %s53
      %s71 = sphi 0, %s71
      %s73 = sphi 0, %s71
      %s74 = sphi 0, %s73
      %s88 = sphi 0, %s74
      %s92 = sphi 0, %s92
      %s94 = sphi 0, %s92
      %s95 = sphi 0, %s94
      %s109 = sphi 0, %s95
      %s113 = sphi 0, %s113
      %s115 = sphi 0, %s113
      %s116 = sphi 0, %s115
      %s130 = sphi 0, %s116
      %s134 = sphi 0, %s134
      %s136 = sphi 0, %s134
      %s137 = sphi 0, %s136
      %s151 = sphi 0, %s137
      %s155 = sphi 0, %s155
      %s157 = sphi 0, %s155
      %s158 = sphi 0, %s157
      %s172 = sphi 0, %s158
      %s178 = sphi 0, %s180
      %s181 = sphi 0, %s178
      %s182 = sphi 0, %s181
      %s198 = sphi 0, %s182
    $region4: #{tpu_custom_call.1} parent=1 // loop_header_branch
      %19 = sbr.rel (%p17) target = $region8
    $region5: #{tpu_custom_call.1} parent=1 // loop_body
      %s21 = ssub.s32 %s16, 1
      %s22 = ssub.s32 %s16, 2
      %s23 = sadd.s32 %s16, 1
      %s24 = ssub.s32 %s16, %s23
      %p25 = scmp.eq.s32.totalorder %s24, 0
      %s27 = sadd.s32 %s26, 1
      %s28 = scalar_select %p25, %s26, %s27
      %p31 = pneg %p25
      %p32 = scmp.eq.s32.totalorder %s16, 1
      %p33 = por %p31, %p32
      %p34 = scmp.ne.s32.totalorder %s26, %s29
      %p35 = scmp.eq.s32.totalorder %s16, 0
      %p36 = por %p34, %p35
      %p37 = scmp.ne.s32.totalorder %s26, %s29
      %p38 = scmp.eq.s32.totalorder %s21, 1
      %p39 = por %p37, %p38
      %p40 = scmp.ne.s32.totalorder %s29, %s30
      %p41 = scmp.eq.s32.totalorder %s21, 0
      %p42 = por %p40, %p41
      %p43 = scmp.ne.s32.totalorder %s29, %s30
      %p44 = scmp.eq.s32.totalorder %s22, 1
      %p45 = por %p43, %p44
      %p47 = scmp.ne.s32.totalorder %s30, %s46
      %p48 = scmp.eq.s32.totalorder %s22, 0
      %p49 = por %p47, %p48
      %s51 = sadd.s32 %s50, 1
      %p54 = scmp.eq.s32.totalorder %s16, 1
      %p55 = scmp.ne.s32.totalorder %s50, %s52
      %p56 = scmp.eq.s32.totalorder %s16, 0
      %p57 = por %p55, %p56
      %p58 = scmp.ne.s32.totalorder %s50, %s52
      %p59 = scmp.eq.s32.totalorder %s21, 1
      %p60 = por %p58, %p59
      %p61 = scmp.ne.s32.totalorder %s52, %s53
      %p62 = scmp.eq.s32.totalorder %s21, 0
      %p63 = por %p61, %p62
      %p64 = scmp.ne.s32.totalorder %s52, %s53
      %p65 = scmp.eq.s32.totalorder %s22, 1
      %p66 = por %p64, %p65
      %p68 = scmp.ne.s32.totalorder %s53, %s67
      %p69 = scmp.eq.s32.totalorder %s22, 0
      %p70 = por %p68, %p69
      %s72 = sadd.s32 %s71, 1
      %p75 = scmp.eq.s32.totalorder %s16, 1
      %p76 = scmp.ne.s32.totalorder %s71, %s73
      %p77 = scmp.eq.s32.totalorder %s16, 0
      %p78 = por %p76, %p77
      %p79 = scmp.ne.s32.totalorder %s71, %s73
      %p80 = scmp.eq.s32.totalorder %s21, 1
      %p81 = por %p79, %p80
      %p82 = scmp.ne.s32.totalorder %s73, %s74
      %p83 = scmp.eq.s32.totalorder %s21, 0
      %p84 = por %p82, %p83
      %p85 = scmp.ne.s32.totalorder %s73, %s74
      %p86 = scmp.eq.s32.totalorder %s22, 1
      %p87 = por %p85, %p86
      %p89 = scmp.ne.s32.totalorder %s74, %s88
      %p90 = scmp.eq.s32.totalorder %s22, 0
      %p91 = por %p89, %p90
      %s93 = sadd.s32 %s92, 1
      %p96 = scmp.eq.s32.totalorder %s16, 1
      %p97 = scmp.ne.s32.totalorder %s92, %s94
      %p98 = scmp.eq.s32.totalorder %s16, 0
      %p99 = por %p97, %p98
      %p100 = scmp.ne.s32.totalorder %s92, %s94
      %p101 = scmp.eq.s32.totalorder %s21, 1
      %p102 = por %p100, %p101
      %p103 = scmp.ne.s32.totalorder %s94, %s95
      %p104 = scmp.eq.s32.totalorder %s21, 0
      %p105 = por %p103, %p104
      %p106 = scmp.ne.s32.totalorder %s94, %s95
      %p107 = scmp.eq.s32.totalorder %s22, 1
      %p108 = por %p106, %p107
      %p110 = scmp.ne.s32.totalorder %s95, %s109
      %p111 = scmp.eq.s32.totalorder %s22, 0
      %p112 = por %p110, %p111
      %s114 = sadd.s32 %s113, 1
      %p117 = scmp.eq.s32.totalorder %s16, 1
      %p118 = scmp.ne.s32.totalorder %s113, %s115
      %p119 = scmp.eq.s32.totalorder %s16, 0
      %p120 = por %p118, %p119
      %p121 = scmp.ne.s32.totalorder %s113, %s115
      %p122 = scmp.eq.s32.totalorder %s21, 1
      %p123 = por %p121, %p122
      %p124 = scmp.ne.s32.totalorder %s115, %s116
      %p125 = scmp.eq.s32.totalorder %s21, 0
      %p126 = por %p124, %p125
      %p127 = scmp.ne.s32.totalorder %s115, %s116
      %p128 = scmp.eq.s32.totalorder %s22, 1
      %p129 = por %p127, %p128
      %p131 = scmp.ne.s32.totalorder %s116, %s130
      %p132 = scmp.eq.s32.totalorder %s22, 0
      %p133 = por %p131, %p132
      %s135 = sadd.s32 %s134, 1
      %p138 = scmp.eq.s32.totalorder %s16, 1
      %p139 = scmp.ne.s32.totalorder %s134, %s136
      %p140 = scmp.eq.s32.totalorder %s16, 0
      %p141 = por %p139, %p140
      %p142 = scmp.ne.s32.totalorder %s134, %s136
      %p143 = scmp.eq.s32.totalorder %s21, 1
      %p144 = por %p142, %p143
      %p145 = scmp.ne.s32.totalorder %s136, %s137
      %p146 = scmp.eq.s32.totalorder %s21, 0
      %p147 = por %p145, %p146
      %p148 = scmp.ne.s32.totalorder %s136, %s137
      %p149 = scmp.eq.s32.totalorder %s22, 1
      %p150 = por %p148, %p149
      %p152 = scmp.ne.s32.totalorder %s137, %s151
      %p153 = scmp.eq.s32.totalorder %s22, 0
      %p154 = por %p152, %p153
      %s156 = sadd.s32 %s155, 1
      %p159 = scmp.eq.s32.totalorder %s16, 1
      %p160 = scmp.ne.s32.totalorder %s155, %s157
      %p161 = scmp.eq.s32.totalorder %s16, 0
      %p162 = por %p160, %p161
      %p163 = scmp.ne.s32.totalorder %s155, %s157
      %p164 = scmp.eq.s32.totalorder %s21, 1
      %p165 = por %p163, %p164
      %p166 = scmp.ne.s32.totalorder %s157, %s158
      %p167 = scmp.eq.s32.totalorder %s21, 0
      %p168 = por %p166, %p167
      %p169 = scmp.ne.s32.totalorder %s157, %s158
      %p170 = scmp.eq.s32.totalorder %s22, 1
      %p171 = por %p169, %p170
      %p173 = scmp.ne.s32.totalorder %s158, %s172
      %p174 = scmp.eq.s32.totalorder %s22, 0
      %p175 = por %p173, %p174
      %s176 = ssub.s32 %s16, %s23
      %p177 = scmp.eq.s32.totalorder %s176, 0
      %s179 = sadd.s32 %s178, 1
      %s180 = scalar_select %p177, %s178, %s179
      %p183 = pneg %p177
      %p184 = scmp.eq.s32.totalorder %s16, 1
      %p185 = por %p183, %p184
      %p186 = scmp.ne.s32.totalorder %s178, %s181
      %p187 = scmp.eq.s32.totalorder %s16, 0
      %p188 = por %p186, %p187
      %p189 = scmp.ne.s32.totalorder %s178, %s181
      %p190 = scmp.eq.s32.totalorder %s21, 1
      %p191 = por %p189, %p190
      %p192 = scmp.ne.s32.totalorder %s181, %s182
      %p193 = scmp.eq.s32.totalorder %s21, 0
      %p194 = por %p192, %p193
      %p195 = scmp.ne.s32.totalorder %s181, %s182
      %p196 = scmp.eq.s32.totalorder %s22, 1
      %p197 = por %p195, %p196
      %p199 = scmp.ne.s32.totalorder %s182, %s198
      %p200 = scmp.eq.s32.totalorder %s22, 0
      %p201 = por %p199, %p200
      %p202 = scmp.le.s32.totalorder 1, %s16
      %p203 = scmp.lt.s32.totalorder %s16, 3
      %p204 = pnand %p202, %p203
      %p205 = pneg %p204
      // Predicated region
      $region9: #{tpu_custom_call.1} parent=5 // pred_check
        _
      $region10: #{tpu_custom_call.1} parent=5 // pred_check_branch
        %207 = sbr.rel (%p204) target = $region12
      $region11: #{tpu_custom_call.1} parent=5 // pred_region
        %s208 = ssub.s32 %s16, 1
        // Predicated region
        $region13: #{tpu_custom_call.1} parent=11 // pred_check
          %p209 = pneg %p63
        $region14: #{tpu_custom_call.1} parent=11 // pred_check_branch
          %211 = sbr.rel (%p209) target = $region16
        $region15: #{tpu_custom_call.1} parent=11 // pred_region
          _
        $region16: #{tpu_custom_call.1} parent=11 // pred_fallthru
          _
        // Predicated region
        $region17: #{tpu_custom_call.1} parent=11 // pred_check
          %p212 = pneg %p84
        $region18: #{tpu_custom_call.1} parent=11 // pred_check_branch
          %214 = sbr.rel (%p212) target = $region20
        $region19: #{tpu_custom_call.1} parent=11 // pred_region
          _
        $region20: #{tpu_custom_call.1} parent=11 // pred_fallthru
          _
        // Predicated region
        $region21: #{tpu_custom_call.1} parent=11 // pred_check
          %p215 = pneg %p105
        $region22: #{tpu_custom_call.1} parent=11 // pred_check_branch
          %217 = sbr.rel (%p215) target = $region24
        $region23: #{tpu_custom_call.1} parent=11 // pred_region
          _
        $region24: #{tpu_custom_call.1} parent=11 // pred_fallthru
          _
        // Predicated region
        $region25: #{tpu_custom_call.1} parent=11 // pred_check
          %p218 = pneg %p126
        $region26: #{tpu_custom_call.1} parent=11 // pred_check_branch
          %220 = sbr.rel (%p218) target = $region28
        $region27: #{tpu_custom_call.1} parent=11 // pred_region
          _
        $region28: #{tpu_custom_call.1} parent=11 // pred_fallthru
          _
        // Predicated region
        $region29: #{tpu_custom_call.1} parent=11 // pred_check
          %p221 = pneg %p147
        $region30: #{tpu_custom_call.1} parent=11 // pred_check_branch
          %223 = sbr.rel (%p221) target = $region32
        $region31: #{tpu_custom_call.1} parent=11 // pred_region
          _
        $region32: #{tpu_custom_call.1} parent=11 // pred_fallthru
          _
        // Predicated region
        $region33: #{tpu_custom_call.1} parent=11 // pred_check
          %p224 = pneg %p168
        $region34: #{tpu_custom_call.1} parent=11 // pred_check_branch
          %226 = sbr.rel (%p224) target = $region36
        $region35: #{tpu_custom_call.1} parent=11 // pred_region
          _
        $region36: #{tpu_custom_call.1} parent=11 // pred_fallthru
          _
      $region12: #{tpu_custom_call.1} parent=5 // pred_fallthru
        _
      %p227 = scmp.lt.s32.totalorder %s16, 2
      // Predicated region
      $region37: #{tpu_custom_call.1} parent=5 // pred_check
        %p228 = pneg %p227
      $region38: #{tpu_custom_call.1} parent=5 // pred_check_branch
        %230 = sbr.rel (%p228) target = $region40
      $region39: #{tpu_custom_call.1} parent=5 // pred_region
        // Predicated region
        $region41: #{tpu_custom_call.1} parent=39 // pred_check
          %p231 = pneg %p36
        $region42: #{tpu_custom_call.1} parent=39 // pred_check_branch
          %233 = sbr.rel (%p231) target = $region44
        $region43: #{tpu_custom_call.1} parent=39 // pred_region
          %p234 = scmp.lt.s32.totalorder %s16, 1
          %s235 = scalar_select %p234, %s16, 1
          %s236 = smul.addr %s235, 2
          %s237 = smul.addr %s236, 4
          %s238 = scalar_lea.vmem %s0, %s237
        $region44: #{tpu_custom_call.1} parent=39 // pred_fallthru
          _
      $region40: #{tpu_custom_call.1} parent=5 // pred_fallthru
        _
      %p239 = scmp.le.s32.totalorder 1, %s16
      %p240 = scmp.lt.s32.totalorder %s16, 3
      %p241 = pnand %p239, %p240
      %p242 = pneg %p241
      // Predicated region
      $region45: #{tpu_custom_call.1} parent=5 // pred_check
        _
      $region46: #{tpu_custom_call.1} parent=5 // pred_check_branch
        %244 = sbr.rel (%p241) target = $region48
      $region47: #{tpu_custom_call.1} parent=5 // pred_region
        %s245 = ssub.s32 %s16, 1
        %p246 = scmp.lt.s32.totalorder %s21, 1
        %s247 = scalar_select %p246, %s21, 1
        %s248 = smul.addr %s247, 2
        %s249 = smul.addr %s248, 4
        %s250 = scalar_lea.vmem %s0, %s249
        %p251 = pneg %p42
        %p252 = pneg %p39
        %p253 = pneg %p63
        %p254 = pneg %p60
        %p255 = pneg %p84
        %p256 = pneg %p81
        %p257 = pneg %p105
        %p258 = pneg %p102
        %p259 = pneg %p126
        %p260 = pneg %p123
        %p261 = pneg %p147
        %p262 = pneg %p144
        %p263 = pneg %p168
        %p264 = pneg %p165
        %p265 = pneg %p194
        %p266 = pneg %p191
        %s267 = sand.u32 %s181, 1
        %s268 = scalar_lea.sflag [#allocation3], %s267
        %s269 = sand.u32 %s181, 1
        %s270 = smul.addr %s269, 16
        %s271 = scalar_lea.vmem [#allocation2], %s270
        %p272 = scmp.lt.s32.totalorder %s21, 1
        %s273 = scalar_select %p272, %s21, 1
        %s274 = smul.addr %s273, 2
        %s275 = smul.addr %s274, 4
        %s276 = scalar_lea.vmem %s0, %s275
        %v278 = vld [vmem:[%s276] sm:$0xff]
        %v279 = vld [vmem:[%s1] sm:$0xf]
        %v280 = vld [vmem:[%s1 + $0x4] sm:$0xf]
        %v281 = vld [vmem:[%s1 + $0x8] sm:$0xf]
        %v282 = vld [vmem:[%s1 + $0xc] sm:$0xf]
        %v283 = vld [vmem:[%s1 + $0x10] sm:$0xf]
        %v284 = vld [vmem:[%s1 + $0x14] sm:$0xf]
        %v285 = vld [vmem:[%s2] sm:$0xff]
        %v286 = vld [vmem:[%s2 + $0x8] sm:$0xff]
        %v287 = vld [vmem:[%s2 + $0x10] sm:$0xff]
        %v288 = vld [vmem:[%s2 + $0x18] sm:$0xff]
        %v289 = vld [vmem:[%s2 + $0x20] sm:$0xff]
        %v290 = vld [vmem:[%s2 + $0x28] sm:$0xff]
        %292 = vset.pattern.permute.xlu0 0
        %293 = vperm.xlu0 %292, %v285
        %v294 = vpop.permute.xlu0 %293
        %297 = vset.pattern.permute.xlu0 0
        %298 = vperm.xlu0 %297, %v286
        %v299 = vpop.permute.xlu0 %298
        %302 = vset.pattern.permute.xlu0 0
        %303 = vperm.xlu0 %302, %v287
        %v304 = vpop.permute.xlu0 %303
        %307 = vset.pattern.permute.xlu0 0
        %308 = vperm.xlu0 %307, %v288
        %v309 = vpop.permute.xlu0 %308
        %312 = vset.pattern.permute.xlu0 0
        %313 = vperm.xlu0 %312, %v289
        %v314 = vpop.permute.xlu0 %313
        %317 = vset.pattern.permute.xlu0 0
        %318 = vperm.xlu0 %317, %v290
        %v319 = vpop.permute.xlu0 %318
        %v327 = vunpack.c.l.b16 %v279
        %v328 = vunpack.c.l.b16 %v280
        %v329 = vunpack.c.l.b16 %v281
        %v330 = vunpack.c.l.b16 %v282
        %v331 = vunpack.c.l.b16 %v283
        %v332 = vunpack.c.l.b16 %v284
        %v333 = vpack.c.b16 %v328, %v327
        %v334 = vpack.c.b16 %v330, %v329
        %v335 = vpack.c.b16 %v332, %v331
        %v337 = vunpack.c.l.b16 %v278
        %v338 = vunpack.c.h.b16 %v278
        %v339 = vpack.c.b16 %v337, %v337
        %v340 = vpack.c.b16 %v338, %v338
        %vm341 = vcmask 64512
        %v343 = vsel %vm341, %v333, 0
        %v346 = vsel %vm341, %v334, 0
        %v349 = vsel %vm341, %v335, 0
        %vm351 = vcmask 1043456
        %v353 = vsel %vm351, %v339, 0
        %v356 = vsel %vm351, %v340, 0
        %358 = vmatprep.subr.bf16.mxu0 0
        %359 = vmatpush1.bf16.msra.mxu0 0
        %360 = vmatprep.subr.bf16.mxu0 0
        %361 = vmatpush1.bf16.msra.mxu0 0
        %362 = vmatprep.subr.bf16.mxu0 0
        %363 = vmatpush1.bf16.msra.mxu0 0
        %364 = vmatprep.subr.bf16.mxu0 0
        %365 = vmatpush1.bf16.msra.mxu0 0
        %366 = vmatprep.subr.bf16.mxu0 0
        %367 = vmatpush1.bf16.msra.mxu0 0
        %368 = vmatprep.subr.bf16.mxu0 0
        %369 = vmatpush1.bf16.msra.mxu0 0
        %370 = vmatprep.subr.bf16.mxu0 0
        %371 = vmatpush1.bf16.msra.mxu0 0
        %372 = vmatprep.subr.bf16.mxu0 %v356
        %373 = vmatpush1.bf16.msra.mxu0 %v353
        %374 = vmatprep.subr.bf16.mxu0 0
        %375 = vmatpush2.bf16.msra.mxu0 0
        %376 = vmatprep.subr.bf16.mxu0 0
        %377 = vmatpush2.bf16.msra.mxu0 0
        %378 = vmatprep.subr.bf16.mxu0 0
        %379 = vmatpush2.bf16.msra.mxu0 0
        %380 = vmatprep.subr.bf16.mxu0 0
        %381 = vmatpush2.bf16.msra.mxu0 0
        %382 = vmatprep.subr.bf16.mxu0 0
        %383 = vmatpush2.bf16.msra.mxu0 0
        %384 = vmatprep.subr.bf16.mxu0 0
        %385 = vmatpush2.bf16.msra.mxu0 0
        %386 = vmatprep.subr.bf16.mxu0 0
        %387 = vmatpush2.bf16.msra.mxu0 0
        %388 = vmatprep.subr.bf16.mxu0 0
        %389 = vmatpush2.bf16.msra.mxu0 0
        %390 = vmatprep.mubr.bf16.mxu0 0
        %391 = vmatmul.mubr.bf16.gmra.mxu0 %v343
        %v392 = vpop.f32.mrf.mxu0
        %v393 = vadd.f32 %v294, %v392
        %v394 = vpop.f32.mrf.mxu0
        %v395 = vadd.f32 %v294, %v394
        %v396 = vpop.f32.mrf.mxu0
        %v397 = vadd.f32 %v299, %v396
        %v398 = vpop.f32.mrf.mxu0
        %v399 = vadd.f32 %v299, %v398
        %400 = vmatprep.mubr.bf16.mxu0 0
        %401 = vmatmul.mubr.bf16.gmra.mxu0 %v346
        %v402 = vpop.f32.mrf.mxu0
        %v403 = vadd.f32 %v304, %v402
        %v404 = vpop.f32.mrf.mxu0
        %v405 = vadd.f32 %v304, %v404
        %v406 = vpop.f32.mrf.mxu0
        %v407 = vadd.f32 %v309, %v406
        %v408 = vpop.f32.mrf.mxu0
        %v409 = vadd.f32 %v309, %v408
        %410 = vmatprep.mubr.bf16.mxu0 0
        %411 = vmatmul.mubr.bf16.gmra.mxu0 %v349
        %v412 = vpop.f32.mrf.mxu0
        %v413 = vadd.f32 %v314, %v412
        %v414 = vpop.f32.mrf.mxu0
        %v415 = vadd.f32 %v314, %v414
        %v416 = vpop.f32.mrf.mxu0
        %v417 = vadd.f32 %v319, %v416
        %v418 = vpop.f32.mrf.mxu0
        %v419 = vadd.f32 %v319, %v418
        %420 = vdwg.mxu0
        %v421 = vmax.f32 %v393, 0.0
        %v422 = vmax.f32 %v395, 0.0
        %v423 = vmax.f32 %v397, 0.0
        %v424 = vmax.f32 %v399, 0.0
        %v425 = vmax.f32 %v403, 0.0
        %v426 = vmax.f32 %v405, 0.0
        %v427 = vmax.f32 %v407, 0.0
        %v428 = vmax.f32 %v409, 0.0
        %v429 = vmax.f32 %v413, 0.0
        %v430 = vmax.f32 %v415, 0.0
        %v431 = vmax.f32 %v417, 0.0
        %v432 = vmax.f32 %v419, 0.0
        %v433 = vmin.f32 %v421, 6.0
        %v434 = vmin.f32 %v422, 6.0
        %v435 = vmin.f32 %v423, 6.0
        %v436 = vmin.f32 %v424, 6.0
        %v437 = vmin.f32 %v425, 6.0
        %v438 = vmin.f32 %v426, 6.0
        %v439 = vmin.f32 %v427, 6.0
        %v440 = vmin.f32 %v428, 6.0
        %v441 = vmin.f32 %v429, 6.0
        %v442 = vmin.f32 %v430, 6.0
        %v443 = vmin.f32 %v431, 6.0
        %v444 = vmin.f32 %v432, 6.0
        %v445 = vld [vmem:[%s3] sm:$0xff]
        %v446 = vld [vmem:[%s3 + $0x8] sm:$0xff]
        %v447 = vld [vmem:[%s3 + $0x10] sm:$0xff]
        %v448 = vld [vmem:[%s3 + $0x18] sm:$0xff]
        %v449 = vld [vmem:[%s3 + $0x20] sm:$0xff]
        %v450 = vld [vmem:[%s3 + $0x28] sm:$0xff]
        %452 = vset.pattern.permute.xlu0 4
        %453 = vperm.xlu0 %452, %v445
        %v454 = vpop.permute.xlu0 %453
        %457 = vset.pattern.permute.xlu0 4
        %458 = vperm.xlu0 %457, %v446
        %v459 = vpop.permute.xlu0 %458
        %462 = vset.pattern.permute.xlu0 4
        %463 = vperm.xlu0 %462, %v447
        %v464 = vpop.permute.xlu0 %463
        %467 = vset.pattern.permute.xlu0 4
        %468 = vperm.xlu0 %467, %v448
        %v469 = vpop.permute.xlu0 %468
        %472 = vset.pattern.permute.xlu0 4
        %473 = vperm.xlu0 %472, %v449
        %v474 = vpop.permute.xlu0 %473
        %477 = vset.pattern.permute.xlu0 4
        %478 = vperm.xlu0 %477, %v450
        %v479 = vpop.permute.xlu0 %478
        %v481 = vmul.f32 %v433, %v454
        %v482 = vmul.f32 %v434, %v454
        %v483 = vmul.f32 %v435, %v459
        %v484 = vmul.f32 %v436, %v459
        %v485 = vmul.f32 %v437, %v464
        %v486 = vmul.f32 %v438, %v464
        %v487 = vmul.f32 %v439, %v469
        %v488 = vmul.f32 %v440, %v469
        %v489 = vmul.f32 %v441, %v474
        %v490 = vmul.f32 %v442, %v474
        %v491 = vmul.f32 %v443, %v479
        %v492 = vmul.f32 %v444, %v479
        %499 = vrot.lane.b32.xlu0 %v434, 17
        %v500 = vpop.permute.xlu0 %499
        %501 = vrot.lane.b32.xlu0 %v436, 17
        %v502 = vpop.permute.xlu0 %501
        %503 = vrot.lane.b32.xlu0 %v438, 17
        %v504 = vpop.permute.xlu0 %503
        %505 = vrot.lane.b32.xlu0 %v440, 17
        %v506 = vpop.permute.xlu0 %505
        %507 = vrot.lane.b32.xlu0 %v442, 17
        %v508 = vpop.permute.xlu0 %507
        %509 = vrot.lane.b32.xlu0 %v444, 17
        %v510 = vpop.permute.xlu0 %509
        %523 = vrot.lane.b32.xlu0 %v433, 17
        %v524 = vpop.permute.xlu0 %523
        %525 = vrot.lane.b32.xlu0 %v435, 17
        %v526 = vpop.permute.xlu0 %525
        %527 = vrot.lane.b32.xlu0 %v437, 17
        %v528 = vpop.permute.xlu0 %527
        %529 = vrot.lane.b32.xlu0 %v439, 17
        %v530 = vpop.permute.xlu0 %529
        %531 = vrot.lane.b32.xlu0 %v441, 17
        %v532 = vpop.permute.xlu0 %531
        %533 = vrot.lane.b32.xlu0 %v443, 17
        %v534 = vpop.permute.xlu0 %533
        %vm535 = vcmask 138240
        %v536 = vsel %vm535, %v524, %v500
        %v537 = vsel %vm535, %v526, %v502
        %v538 = vsel %vm535, %v528, %v504
        %v539 = vsel %vm535, %v530, %v506
        %v540 = vsel %vm535, %v532, %v508
        %v541 = vsel %vm535, %v534, %v510
        %v554 = vsel %vm535, %v500, %v524
        %v555 = vsel %vm535, %v502, %v526
        %v556 = vsel %vm535, %v504, %v528
        %v557 = vsel %vm535, %v506, %v530
        %v558 = vsel %vm535, %v508, %v532
        %v559 = vsel %vm535, %v510, %v534
        %v560 = vld [vmem:[%s4] ss:$8 sm:$0x3]
        %v562 = vlaneseq
        %v563 = vshrl.u32 %v562, 7
        %v564 = vsub.s32 0, %v563
        %v565 = vrot.slane %v560, %v564
        %v566 = vlaneseq
        %v567 = vshrl.u32 %v566, 7
        %v568 = vsub.s32 1, %v567
        %v569 = vrot.slane %v560, %v568
        %v572 = vmul.f32 %v554, %v565
        %v573 = vmul.f32 %v536, %v569
        %v574 = vmul.f32 %v555, %v565
        %v575 = vmul.f32 %v537, %v569
        %v576 = vmul.f32 %v556, %v565
        %v577 = vmul.f32 %v538, %v569
        %v578 = vmul.f32 %v557, %v565
        %v579 = vmul.f32 %v539, %v569
        %v580 = vmul.f32 %v558, %v565
        %v581 = vmul.f32 %v540, %v569
        %v582 = vmul.f32 %v559, %v565
        %v583 = vmul.f32 %v541, %v569
        %584 = vset.pattern.permute.xlu0 0
        %585 = vperm.xlu0 %584, %v445
        %v586 = vpop.permute.xlu0 %585
        %588 = vset.pattern.permute.xlu0 0
        %589 = vperm.xlu0 %588, %v446
        %v590 = vpop.permute.xlu0 %589
        %592 = vset.pattern.permute.xlu0 0
        %593 = vperm.xlu0 %592, %v447
        %v594 = vpop.permute.xlu0 %593
        %596 = vset.pattern.permute.xlu0 0
        %597 = vperm.xlu0 %596, %v448
        %v598 = vpop.permute.xlu0 %597
        %600 = vset.pattern.permute.xlu0 0
        %601 = vperm.xlu0 %600, %v449
        %v602 = vpop.permute.xlu0 %601
        %604 = vset.pattern.permute.xlu0 0
        %605 = vperm.xlu0 %604, %v450
        %v606 = vpop.permute.xlu0 %605
        %v608 = vmul.f32 %v572, %v586
        %v609 = vmul.f32 %v573, %v586
        %v610 = vmul.f32 %v574, %v590
        %v611 = vmul.f32 %v575, %v590
        %v612 = vmul.f32 %v576, %v594
        %v613 = vmul.f32 %v577, %v594
        %v614 = vmul.f32 %v578, %v598
        %v615 = vmul.f32 %v579, %v598
        %v616 = vmul.f32 %v580, %v602
        %v617 = vmul.f32 %v581, %v602
        %v618 = vmul.f32 %v582, %v606
        %v619 = vmul.f32 %v583, %v606
        %v620 = vadd.f32 %v481, %v608
        %v621 = vadd.f32 %v482, %v609
        %v622 = vadd.f32 %v483, %v610
        %v623 = vadd.f32 %v484, %v611
        %v624 = vadd.f32 %v485, %v612
        %v625 = vadd.f32 %v486, %v613
        %v626 = vadd.f32 %v487, %v614
        %v627 = vadd.f32 %v488, %v615
        %v628 = vadd.f32 %v489, %v616
        %v629 = vadd.f32 %v490, %v617
        %v630 = vadd.f32 %v491, %v618
        %v631 = vadd.f32 %v492, %v619
        %632 = vrot.lane.b32.xlu0 %v434, 16
        %v633 = vpop.permute.xlu0 %632
        %634 = vrot.lane.b32.xlu0 %v436, 16
        %v635 = vpop.permute.xlu0 %634
        %636 = vrot.lane.b32.xlu0 %v438, 16
        %v637 = vpop.permute.xlu0 %636
        %638 = vrot.lane.b32.xlu0 %v440, 16
        %v639 = vpop.permute.xlu0 %638
        %640 = vrot.lane.b32.xlu0 %v442, 16
        %v641 = vpop.permute.xlu0 %640
        %642 = vrot.lane.b32.xlu0 %v444, 16
        %v643 = vpop.permute.xlu0 %642
        %650 = vrot.lane.b32.xlu0 %v433, 16
        %v651 = vpop.permute.xlu0 %650
        %652 = vrot.lane.b32.xlu0 %v435, 16
        %v653 = vpop.permute.xlu0 %652
        %654 = vrot.lane.b32.xlu0 %v437, 16
        %v655 = vpop.permute.xlu0 %654
        %656 = vrot.lane.b32.xlu0 %v439, 16
        %v657 = vpop.permute.xlu0 %656
        %658 = vrot.lane.b32.xlu0 %v441, 16
        %v659 = vpop.permute.xlu0 %658
        %660 = vrot.lane.b32.xlu0 %v443, 16
        %v661 = vpop.permute.xlu0 %660
        %vm662 = vcmask 130048
        %v663 = vsel %vm662, %v651, %v633
        %v664 = vsel %vm662, %v653, %v635
        %v665 = vsel %vm662, %v655, %v637
        %v666 = vsel %vm662, %v657, %v639
        %v667 = vsel %vm662, %v659, %v641
        %v668 = vsel %vm662, %v661, %v643
        %v681 = vsel %vm662, %v633, %v651
        %v682 = vsel %vm662, %v635, %v653
        %v683 = vsel %vm662, %v637, %v655
        %v684 = vsel %vm662, %v639, %v657
        %v685 = vsel %vm662, %v641, %v659
        %v686 = vsel %vm662, %v643, %v661
        %s687 = scalar_lea.vmem %s4, 1
        %v688 = vld [vmem:[%s687] ss:$8 sm:$0x3]
        %v690 = vlaneseq
        %v691 = vshrl.u32 %v690, 7
        %v692 = vsub.s32 0, %v691
        %v693 = vrot.slane %v688, %v692
        %v694 = vlaneseq
        %v695 = vshrl.u32 %v694, 7
        %v696 = vsub.s32 1, %v695
        %v697 = vrot.slane %v688, %v696
        %v700 = vmul.f32 %v681, %v693
        %v701 = vmul.f32 %v663, %v697
        %v702 = vmul.f32 %v682, %v693
        %v703 = vmul.f32 %v664, %v697
        %v704 = vmul.f32 %v683, %v693
        %v705 = vmul.f32 %v665, %v697
        %v706 = vmul.f32 %v684, %v693
        %v707 = vmul.f32 %v666, %v697
        %v708 = vmul.f32 %v685, %v693
        %v709 = vmul.f32 %v667, %v697
        %v710 = vmul.f32 %v686, %v693
        %v711 = vmul.f32 %v668, %v697
        %712 = vset.pattern.permute.xlu0 1
        %713 = vperm.xlu0 %712, %v445
        %v714 = vpop.permute.xlu0 %713
        %716 = vset.pattern.permute.xlu0 1
        %717 = vperm.xlu0 %716, %v446
        %v718 = vpop.permute.xlu0 %717
        %720 = vset.pattern.permute.xlu0 1
        %721 = vperm.xlu0 %720, %v447
        %v722 = vpop.permute.xlu0 %721
        %724 = vset.pattern.permute.xlu0 1
        %725 = vperm.xlu0 %724, %v448
        %v726 = vpop.permute.xlu0 %725
        %728 = vset.pattern.permute.xlu0 1
        %729 = vperm.xlu0 %728, %v449
        %v730 = vpop.permute.xlu0 %729
        %732 = vset.pattern.permute.xlu0 1
        %733 = vperm.xlu0 %732, %v450
        %v734 = vpop.permute.xlu0 %733
        %v736 = vmul.f32 %v700, %v714
        %v737 = vmul.f32 %v701, %v714
        %v738 = vmul.f32 %v702, %v718
        %v739 = vmul.f32 %v703, %v718
        %v740 = vmul.f32 %v704, %v722
        %v741 = vmul.f32 %v705, %v722
        %v742 = vmul.f32 %v706, %v726
        %v743 = vmul.f32 %v707, %v726
        %v744 = vmul.f32 %v708, %v730
        %v745 = vmul.f32 %v709, %v730
        %v746 = vmul.f32 %v710, %v734
        %v747 = vmul.f32 %v711, %v734
        %v748 = vadd.f32 %v620, %v736
        %v749 = vadd.f32 %v621, %v737
        %v750 = vadd.f32 %v622, %v738
        %v751 = vadd.f32 %v623, %v739
        %v752 = vadd.f32 %v624, %v740
        %v753 = vadd.f32 %v625, %v741
        %v754 = vadd.f32 %v626, %v742
        %v755 = vadd.f32 %v627, %v743
        %v756 = vadd.f32 %v628, %v744
        %v757 = vadd.f32 %v629, %v745
        %v758 = vadd.f32 %v630, %v746
        %v759 = vadd.f32 %v631, %v747
        %760 = vrot.lane.b32.xlu0 %v434, 15
        %v761 = vpop.permute.xlu0 %760
        %762 = vrot.lane.b32.xlu0 %v436, 15
        %v763 = vpop.permute.xlu0 %762
        %764 = vrot.lane.b32.xlu0 %v438, 15
        %v765 = vpop.permute.xlu0 %764
        %766 = vrot.lane.b32.xlu0 %v440, 15
        %v767 = vpop.permute.xlu0 %766
        %768 = vrot.lane.b32.xlu0 %v442, 15
        %v769 = vpop.permute.xlu0 %768
        %770 = vrot.lane.b32.xlu0 %v444, 15
        %v771 = vpop.permute.xlu0 %770
        %778 = vrot.lane.b32.xlu0 %v433, 15
        %v779 = vpop.permute.xlu0 %778
        %780 = vrot.lane.b32.xlu0 %v435, 15
        %v781 = vpop.permute.xlu0 %780
        %782 = vrot.lane.b32.xlu0 %v437, 15
        %v783 = vpop.permute.xlu0 %782
        %784 = vrot.lane.b32.xlu0 %v439, 15
        %v785 = vpop.permute.xlu0 %784
        %786 = vrot.lane.b32.xlu0 %v441, 15
        %v787 = vpop.permute.xlu0 %786
        %788 = vrot.lane.b32.xlu0 %v443, 15
        %v789 = vpop.permute.xlu0 %788
        %vm790 = vcmask 121856
        %v791 = vsel %vm790, %v779, %v761
        %v792 = vsel %vm790, %v781, %v763
        %v793 = vsel %vm790, %v783, %v765
        %v794 = vsel %vm790, %v785, %v767
        %v795 = vsel %vm790, %v787, %v769
        %v796 = vsel %vm790, %v789, %v771
        %v809 = vsel %vm790, %v761, %v779
        %v810 = vsel %vm790, %v763, %v781
        %v811 = vsel %vm790, %v765, %v783
        %v812 = vsel %vm790, %v767, %v785
        %v813 = vsel %vm790, %v769, %v787
        %v814 = vsel %vm790, %v771, %v789
        %s815 = scalar_lea.vmem %s4, 2
        %v816 = vld [vmem:[%s815] ss:$8 sm:$0x3]
        %v818 = vlaneseq
        %v819 = vshrl.u32 %v818, 7
        %v820 = vsub.s32 0, %v819
        %v821 = vrot.slane %v816, %v820
        %v822 = vlaneseq
        %v823 = vshrl.u32 %v822, 7
        %v824 = vsub.s32 1, %v823
        %v825 = vrot.slane %v816, %v824
        %v828 = vmul.f32 %v809, %v821
        %v829 = vmul.f32 %v791, %v825
        %v830 = vmul.f32 %v810, %v821
        %v831 = vmul.f32 %v792, %v825
        %v832 = vmul.f32 %v811, %v821
        %v833 = vmul.f32 %v793, %v825
        %v834 = vmul.f32 %v812, %v821
        %v835 = vmul.f32 %v794, %v825
        %v836 = vmul.f32 %v813, %v821
        %v837 = vmul.f32 %v795, %v825
        %v838 = vmul.f32 %v814, %v821
        %v839 = vmul.f32 %v796, %v825
        %840 = vset.pattern.permute.xlu0 2
        %841 = vperm.xlu0 %840, %v445
        %v842 = vpop.permute.xlu0 %841
        %844 = vset.pattern.permute.xlu0 2
        %845 = vperm.xlu0 %844, %v446
        %v846 = vpop.permute.xlu0 %845
        %848 = vset.pattern.permute.xlu0 2
        %849 = vperm.xlu0 %848, %v447
        %v850 = vpop.permute.xlu0 %849
        %852 = vset.pattern.permute.xlu0 2
        %853 = vperm.xlu0 %852, %v448
        %v854 = vpop.permute.xlu0 %853
        %856 = vset.pattern.permute.xlu0 2
        %857 = vperm.xlu0 %856, %v449
        %v858 = vpop.permute.xlu0 %857
        %860 = vset.pattern.permute.xlu0 2
        %861 = vperm.xlu0 %860, %v450
        %v862 = vpop.permute.xlu0 %861
        %v864 = vmul.f32 %v828, %v842
        %v865 = vmul.f32 %v829, %v842
        %v866 = vmul.f32 %v830, %v846
        %v867 = vmul.f32 %v831, %v846
        %v868 = vmul.f32 %v832, %v850
        %v869 = vmul.f32 %v833, %v850
        %v870 = vmul.f32 %v834, %v854
        %v871 = vmul.f32 %v835, %v854
        %v872 = vmul.f32 %v836, %v858
        %v873 = vmul.f32 %v837, %v858
        %v874 = vmul.f32 %v838, %v862
        %v875 = vmul.f32 %v839, %v862
        %v876 = vadd.f32 %v748, %v864
        %v877 = vadd.f32 %v749, %v865
        %v878 = vadd.f32 %v750, %v866
        %v879 = vadd.f32 %v751, %v867
        %v880 = vadd.f32 %v752, %v868
        %v881 = vadd.f32 %v753, %v869
        %v882 = vadd.f32 %v754, %v870
        %v883 = vadd.f32 %v755, %v871
        %v884 = vadd.f32 %v756, %v872
        %v885 = vadd.f32 %v757, %v873
        %v886 = vadd.f32 %v758, %v874
        %v887 = vadd.f32 %v759, %v875
        %888 = vrot.lane.b32.xlu0 %v434, 1
        %v889 = vpop.permute.xlu0 %888
        %890 = vrot.lane.b32.xlu0 %v436, 1
        %v891 = vpop.permute.xlu0 %890
        %892 = vrot.lane.b32.xlu0 %v438, 1
        %v893 = vpop.permute.xlu0 %892
        %894 = vrot.lane.b32.xlu0 %v440, 1
        %v895 = vpop.permute.xlu0 %894
        %896 = vrot.lane.b32.xlu0 %v442, 1
        %v897 = vpop.permute.xlu0 %896
        %898 = vrot.lane.b32.xlu0 %v444, 1
        %v899 = vpop.permute.xlu0 %898
        %906 = vrot.lane.b32.xlu0 %v433, 1
        %v907 = vpop.permute.xlu0 %906
        %908 = vrot.lane.b32.xlu0 %v435, 1
        %v909 = vpop.permute.xlu0 %908
        %910 = vrot.lane.b32.xlu0 %v437, 1
        %v911 = vpop.permute.xlu0 %910
        %912 = vrot.lane.b32.xlu0 %v439, 1
        %v913 = vpop.permute.xlu0 %912
        %914 = vrot.lane.b32.xlu0 %v441, 1
        %v915 = vpop.permute.xlu0 %914
        %916 = vrot.lane.b32.xlu0 %v443, 1
        %v917 = vpop.permute.xlu0 %916
        %vm918 = vcmask 7168
        %v919 = vsel %vm918, %v907, %v889
        %v920 = vsel %vm918, %v909, %v891
        %v921 = vsel %vm918, %v911, %v893
        %v922 = vsel %vm918, %v913, %v895
        %v923 = vsel %vm918, %v915, %v897
        %v924 = vsel %vm918, %v917, %v899
        %v937 = vsel %vm918, %v889, %v907
        %v938 = vsel %vm918, %v891, %v909
        %v939 = vsel %vm918, %v893, %v911
        %v940 = vsel %vm918, %v895, %v913
        %v941 = vsel %vm918, %v897, %v915
        %v942 = vsel %vm918, %v899, %v917
        %s943 = scalar_lea.vmem %s4, 3
        %v944 = vld [vmem:[%s943] ss:$8 sm:$0x3]
        %v946 = vlaneseq
        %v947 = vshrl.u32 %v946, 7
        %v948 = vsub.s32 0, %v947
        %v949 = vrot.slane %v944, %v948
        %v950 = vlaneseq
        %v951 = vshrl.u32 %v950, 7
        %v952 = vsub.s32 1, %v951
        %v953 = vrot.slane %v944, %v952
        %v956 = vmul.f32 %v937, %v949
        %v957 = vmul.f32 %v919, %v953
        %v958 = vmul.f32 %v938, %v949
        %v959 = vmul.f32 %v920, %v953
        %v960 = vmul.f32 %v939, %v949
        %v961 = vmul.f32 %v921, %v953
        %v962 = vmul.f32 %v940, %v949
        %v963 = vmul.f32 %v922, %v953
        %v964 = vmul.f32 %v941, %v949
        %v965 = vmul.f32 %v923, %v953
        %v966 = vmul.f32 %v942, %v949
        %v967 = vmul.f32 %v924, %v953
        %968 = vset.pattern.permute.xlu0 3
        %969 = vperm.xlu0 %968, %v445
        %v970 = vpop.permute.xlu0 %969
        %972 = vset.pattern.permute.xlu0 3
        %973 = vperm.xlu0 %972, %v446
        %v974 = vpop.permute.xlu0 %973
        %976 = vset.pattern.permute.xlu0 3
        %977 = vperm.xlu0 %976, %v447
        %v978 = vpop.permute.xlu0 %977
        %980 = vset.pattern.permute.xlu0 3
        %981 = vperm.xlu0 %980, %v448
        %v982 = vpop.permute.xlu0 %981
        %984 = vset.pattern.permute.xlu0 3
        %985 = vperm.xlu0 %984, %v449
        %v986 = vpop.permute.xlu0 %985
        %988 = vset.pattern.permute.xlu0 3
        %989 = vperm.xlu0 %988, %v450
        %v990 = vpop.permute.xlu0 %989
        %v992 = vmul.f32 %v956, %v970
        %v993 = vmul.f32 %v957, %v970
        %v994 = vmul.f32 %v958, %v974
        %v995 = vmul.f32 %v959, %v974
        %v996 = vmul.f32 %v960, %v978
        %v997 = vmul.f32 %v961, %v978
        %v998 = vmul.f32 %v962, %v982
        %v999 = vmul.f32 %v963, %v982
        %v1000 = vmul.f32 %v964, %v986
        %v1001 = vmul.f32 %v965, %v986
        %v1002 = vmul.f32 %v966, %v990
        %v1003 = vmul.f32 %v967, %v990
        %v1004 = vadd.f32 %v876, %v992
        %v1005 = vadd.f32 %v877, %v993
        %v1006 = vadd.f32 %v878, %v994
        %v1007 = vadd.f32 %v879, %v995
        %v1008 = vadd.f32 %v880, %v996
        %v1009 = vadd.f32 %v881, %v997
        %v1010 = vadd.f32 %v882, %v998
        %v1011 = vadd.f32 %v883, %v999
        %v1012 = vadd.f32 %v884, %v1000
        %v1013 = vadd.f32 %v885, %v1001
        %v1014 = vadd.f32 %v886, %v1002
        %v1015 = vadd.f32 %v887, %v1003
        %1016 = vrot.lane.b32.xlu0 %v433, 127
        %v1017 = vpop.permute.xlu0 %1016
        %1018 = vrot.lane.b32.xlu0 %v434, 127
        %v1019 = vpop.permute.xlu0 %1018
        %1020 = vrot.lane.b32.xlu0 %v435, 127
        %v1021 = vpop.permute.xlu0 %1020
        %1022 = vrot.lane.b32.xlu0 %v436, 127
        %v1023 = vpop.permute.xlu0 %1022
        %1024 = vrot.lane.b32.xlu0 %v437, 127
        %v1025 = vpop.permute.xlu0 %1024
        %1026 = vrot.lane.b32.xlu0 %v438, 127
        %v1027 = vpop.permute.xlu0 %1026
        %1028 = vrot.lane.b32.xlu0 %v439, 127
        %v1029 = vpop.permute.xlu0 %1028
        %1030 = vrot.lane.b32.xlu0 %v440, 127
        %v1031 = vpop.permute.xlu0 %1030
        %1032 = vrot.lane.b32.xlu0 %v441, 127
        %v1033 = vpop.permute.xlu0 %1032
        %1034 = vrot.lane.b32.xlu0 %v442, 127
        %v1035 = vpop.permute.xlu0 %1034
        %1036 = vrot.lane.b32.xlu0 %v443, 127
        %v1037 = vpop.permute.xlu0 %1036
        %1038 = vrot.lane.b32.xlu0 %v444, 127
        %v1039 = vpop.permute.xlu0 %1038
        %vm1040 = vcmask 1039360
        %v1041 = vsel %vm1040, %v1017, %v1019
        %v1042 = vsel %vm1040, %v1021, %v1023
        %v1043 = vsel %vm1040, %v1025, %v1027
        %v1044 = vsel %vm1040, %v1029, %v1031
        %v1045 = vsel %vm1040, %v1033, %v1035
        %v1046 = vsel %vm1040, %v1037, %v1039
        %v1065 = vsel %vm1040, %v1019, %v1017
        %v1066 = vsel %vm1040, %v1023, %v1021
        %v1067 = vsel %vm1040, %v1027, %v1025
        %v1068 = vsel %vm1040, %v1031, %v1029
        %v1069 = vsel %vm1040, %v1035, %v1033
        %v1070 = vsel %vm1040, %v1039, %v1037
        %s1071 = scalar_lea.vmem %s4, 5
        %v1072 = vld [vmem:[%s1071] ss:$8 sm:$0x3]
        %v1074 = vlaneseq
        %v1075 = vshrl.u32 %v1074, 7
        %v1076 = vsub.s32 0, %v1075
        %v1077 = vrot.slane %v1072, %v1076
        %v1078 = vlaneseq
        %v1079 = vshrl.u32 %v1078, 7
        %v1080 = vsub.s32 1, %v1079
        %v1081 = vrot.slane %v1072, %v1080
        %v1084 = vmul.f32 %v1041, %v1077
        %v1085 = vmul.f32 %v1065, %v1081
        %v1086 = vmul.f32 %v1042, %v1077
        %v1087 = vmul.f32 %v1066, %v1081
        %v1088 = vmul.f32 %v1043, %v1077
        %v1089 = vmul.f32 %v1067, %v1081
        %v1090 = vmul.f32 %v1044, %v1077
        %v1091 = vmul.f32 %v1068, %v1081
        %v1092 = vmul.f32 %v1045, %v1077
        %v1093 = vmul.f32 %v1069, %v1081
        %v1094 = vmul.f32 %v1046, %v1077
        %v1095 = vmul.f32 %v1070, %v1081
        %1096 = vset.pattern.permute.xlu0 5
        %1097 = vperm.xlu0 %1096, %v445
        %v1098 = vpop.permute.xlu0 %1097
        %1100 = vset.pattern.permute.xlu0 5
        %1101 = vperm.xlu0 %1100, %v446
        %v1102 = vpop.permute.xlu0 %1101
        %1104 = vset.pattern.permute.xlu0 5
        %1105 = vperm.xlu0 %1104, %v447
        %v1106 = vpop.permute.xlu0 %1105
        %1108 = vset.pattern.permute.xlu0 5
        %1109 = vperm.xlu0 %1108, %v448
        %v1110 = vpop.permute.xlu0 %1109
        %1112 = vset.pattern.permute.xlu0 5
        %1113 = vperm.xlu0 %1112, %v449
        %v1114 = vpop.permute.xlu0 %1113
        %1116 = vset.pattern.permute.xlu0 5
        %1117 = vperm.xlu0 %1116, %v450
        %v1118 = vpop.permute.xlu0 %1117
        %v1120 = vmul.f32 %v1084, %v1098
        %v1121 = vmul.f32 %v1085, %v1098
        %v1122 = vmul.f32 %v1086, %v1102
        %v1123 = vmul.f32 %v1087, %v1102
        %v1124 = vmul.f32 %v1088, %v1106
        %v1125 = vmul.f32 %v1089, %v1106
        %v1126 = vmul.f32 %v1090, %v1110
        %v1127 = vmul.f32 %v1091, %v1110
        %v1128 = vmul.f32 %v1092, %v1114
        %v1129 = vmul.f32 %v1093, %v1114
        %v1130 = vmul.f32 %v1094, %v1118
        %v1131 = vmul.f32 %v1095, %v1118
        %v1132 = vadd.f32 %v1004, %v1120
        %v1133 = vadd.f32 %v1005, %v1121
        %v1134 = vadd.f32 %v1006, %v1122
        %v1135 = vadd.f32 %v1007, %v1123
        %v1136 = vadd.f32 %v1008, %v1124
        %v1137 = vadd.f32 %v1009, %v1125
        %v1138 = vadd.f32 %v1010, %v1126
        %v1139 = vadd.f32 %v1011, %v1127
        %v1140 = vadd.f32 %v1012, %v1128
        %v1141 = vadd.f32 %v1013, %v1129
        %v1142 = vadd.f32 %v1014, %v1130
        %v1143 = vadd.f32 %v1015, %v1131
        %1144 = vrot.lane.b32.xlu0 %v433, 113
        %v1145 = vpop.permute.xlu0 %1144
        %1146 = vrot.lane.b32.xlu0 %v434, 113
        %v1147 = vpop.permute.xlu0 %1146
        %1148 = vrot.lane.b32.xlu0 %v435, 113
        %v1149 = vpop.permute.xlu0 %1148
        %1150 = vrot.lane.b32.xlu0 %v436, 113
        %v1151 = vpop.permute.xlu0 %1150
        %1152 = vrot.lane.b32.xlu0 %v437, 113
        %v1153 = vpop.permute.xlu0 %1152
        %1154 = vrot.lane.b32.xlu0 %v438, 113
        %v1155 = vpop.permute.xlu0 %1154
        %1156 = vrot.lane.b32.xlu0 %v439, 113
        %v1157 = vpop.permute.xlu0 %1156
        %1158 = vrot.lane.b32.xlu0 %v440, 113
        %v1159 = vpop.permute.xlu0 %1158
        %1160 = vrot.lane.b32.xlu0 %v441, 113
        %v1161 = vpop.permute.xlu0 %1160
        %1162 = vrot.lane.b32.xlu0 %v442, 113
        %v1163 = vpop.permute.xlu0 %1162
        %1164 = vrot.lane.b32.xlu0 %v443, 113
        %v1165 = vpop.permute.xlu0 %1164
        %1166 = vrot.lane.b32.xlu0 %v444, 113
        %v1167 = vpop.permute.xlu0 %1166
        %vm1168 = vcmask 924672
        %v1169 = vsel %vm1168, %v1145, %v1147
        %v1170 = vsel %vm1168, %v1149, %v1151
        %v1171 = vsel %vm1168, %v1153, %v1155
        %v1172 = vsel %vm1168, %v1157, %v1159
        %v1173 = vsel %vm1168, %v1161, %v1163
        %v1174 = vsel %vm1168, %v1165, %v1167
        %v1193 = vsel %vm1168, %v1147, %v1145
        %v1194 = vsel %vm1168, %v1151, %v1149
        %v1195 = vsel %vm1168, %v1155, %v1153
        %v1196 = vsel %vm1168, %v1159, %v1157
        %v1197 = vsel %vm1168, %v1163, %v1161
        %v1198 = vsel %vm1168, %v1167, %v1165
        %s1199 = scalar_lea.vmem %s4, 6
        %v1200 = vld [vmem:[%s1199] ss:$8 sm:$0x3]
        %v1202 = vlaneseq
        %v1203 = vshrl.u32 %v1202, 7
        %v1204 = vsub.s32 0, %v1203
        %v1205 = vrot.slane %v1200, %v1204
        %v1206 = vlaneseq
        %v1207 = vshrl.u32 %v1206, 7
        %v1208 = vsub.s32 1, %v1207
        %v1209 = vrot.slane %v1200, %v1208
        %v1212 = vmul.f32 %v1169, %v1205
        %v1213 = vmul.f32 %v1193, %v1209
        %v1214 = vmul.f32 %v1170, %v1205
        %v1215 = vmul.f32 %v1194, %v1209
        %v1216 = vmul.f32 %v1171, %v1205
        %v1217 = vmul.f32 %v1195, %v1209
        %v1218 = vmul.f32 %v1172, %v1205
        %v1219 = vmul.f32 %v1196, %v1209
        %v1220 = vmul.f32 %v1173, %v1205
        %v1221 = vmul.f32 %v1197, %v1209
        %v1222 = vmul.f32 %v1174, %v1205
        %v1223 = vmul.f32 %v1198, %v1209
        %1224 = vset.pattern.permute.xlu0 6
        %1225 = vperm.xlu0 %1224, %v445
        %v1226 = vpop.permute.xlu0 %1225
        %1228 = vset.pattern.permute.xlu0 6
        %1229 = vperm.xlu0 %1228, %v446
        %v1230 = vpop.permute.xlu0 %1229
        %1232 = vset.pattern.permute.xlu0 6
        %1233 = vperm.xlu0 %1232, %v447
        %v1234 = vpop.permute.xlu0 %1233
        %1236 = vset.pattern.permute.xlu0 6
        %1237 = vperm.xlu0 %1236, %v448
        %v1238 = vpop.permute.xlu0 %1237
        %1240 = vset.pattern.permute.xlu0 6
        %1241 = vperm.xlu0 %1240, %v449
        %v1242 = vpop.permute.xlu0 %1241
        %1244 = vset.pattern.permute.xlu0 6
        %1245 = vperm.xlu0 %1244, %v450
        %v1246 = vpop.permute.xlu0 %1245
        %v1248 = vmul.f32 %v1212, %v1226
        %v1249 = vmul.f32 %v1213, %v1226
        %v1250 = vmul.f32 %v1214, %v1230
        %v1251 = vmul.f32 %v1215, %v1230
        %v1252 = vmul.f32 %v1216, %v1234
        %v1253 = vmul.f32 %v1217, %v1234
        %v1254 = vmul.f32 %v1218, %v1238
        %v1255 = vmul.f32 %v1219, %v1238
        %v1256 = vmul.f32 %v1220, %v1242
        %v1257 = vmul.f32 %v1221, %v1242
        %v1258 = vmul.f32 %v1222, %v1246
        %v1259 = vmul.f32 %v1223, %v1246
        %v1260 = vadd.f32 %v1132, %v1248
        %v1261 = vadd.f32 %v1133, %v1249
        %v1262 = vadd.f32 %v1134, %v1250
        %v1263 = vadd.f32 %v1135, %v1251
        %v1264 = vadd.f32 %v1136, %v1252
        %v1265 = vadd.f32 %v1137, %v1253
        %v1266 = vadd.f32 %v1138, %v1254
        %v1267 = vadd.f32 %v1139, %v1255
        %v1268 = vadd.f32 %v1140, %v1256
        %v1269 = vadd.f32 %v1141, %v1257
        %v1270 = vadd.f32 %v1142, %v1258
        %v1271 = vadd.f32 %v1143, %v1259
        %1272 = vrot.lane.b32.xlu0 %v433, 112
        %v1273 = vpop.permute.xlu0 %1272
        %1274 = vrot.lane.b32.xlu0 %v434, 112
        %v1275 = vpop.permute.xlu0 %1274
        %1276 = vrot.lane.b32.xlu0 %v435, 112
        %v1277 = vpop.permute.xlu0 %1276
        %1278 = vrot.lane.b32.xlu0 %v436, 112
        %v1279 = vpop.permute.xlu0 %1278
        %1280 = vrot.lane.b32.xlu0 %v437, 112
        %v1281 = vpop.permute.xlu0 %1280
        %1282 = vrot.lane.b32.xlu0 %v438, 112
        %v1283 = vpop.permute.xlu0 %1282
        %1284 = vrot.lane.b32.xlu0 %v439, 112
        %v1285 = vpop.permute.xlu0 %1284
        %1286 = vrot.lane.b32.xlu0 %v440, 112
        %v1287 = vpop.permute.xlu0 %1286
        %1288 = vrot.lane.b32.xlu0 %v441, 112
        %v1289 = vpop.permute.xlu0 %1288
        %1290 = vrot.lane.b32.xlu0 %v442, 112
        %v1291 = vpop.permute.xlu0 %1290
        %1292 = vrot.lane.b32.xlu0 %v443, 112
        %v1293 = vpop.permute.xlu0 %1292
        %1294 = vrot.lane.b32.xlu0 %v444, 112
        %v1295 = vpop.permute.xlu0 %1294
        %vm1296 = vcmask 916480
        %v1297 = vsel %vm1296, %v1273, %v1275
        %v1298 = vsel %vm1296, %v1277, %v1279
        %v1299 = vsel %vm1296, %v1281, %v1283
        %v1300 = vsel %vm1296, %v1285, %v1287
        %v1301 = vsel %vm1296, %v1289, %v1291
        %v1302 = vsel %vm1296, %v1293, %v1295
        %v1321 = vsel %vm1296, %v1275, %v1273
        %v1322 = vsel %vm1296, %v1279, %v1277
        %v1323 = vsel %vm1296, %v1283, %v1281
        %v1324 = vsel %vm1296, %v1287, %v1285
        %v1325 = vsel %vm1296, %v1291, %v1289
        %v1326 = vsel %vm1296, %v1295, %v1293
        %s1327 = scalar_lea.vmem %s4, 7
        %v1328 = vld [vmem:[%s1327] ss:$8 sm:$0x3]
        %v1330 = vlaneseq
        %v1331 = vshrl.u32 %v1330, 7
        %v1332 = vsub.s32 0, %v1331
        %v1333 = vrot.slane %v1328, %v1332
        %v1334 = vlaneseq
        %v1335 = vshrl.u32 %v1334, 7
        %v1336 = vsub.s32 1, %v1335
        %v1337 = vrot.slane %v1328, %v1336
        %v1340 = vmul.f32 %v1297, %v1333
        %v1341 = vmul.f32 %v1321, %v1337
        %v1342 = vmul.f32 %v1298, %v1333
        %v1343 = vmul.f32 %v1322, %v1337
        %v1344 = vmul.f32 %v1299, %v1333
        %v1345 = vmul.f32 %v1323, %v1337
        %v1346 = vmul.f32 %v1300, %v1333
        %v1347 = vmul.f32 %v1324, %v1337
        %v1348 = vmul.f32 %v1301, %v1333
        %v1349 = vmul.f32 %v1325, %v1337
        %v1350 = vmul.f32 %v1302, %v1333
        %v1351 = vmul.f32 %v1326, %v1337
        %1352 = vset.pattern.permute.xlu0 7
        %1353 = vperm.xlu0 %1352, %v445
        %v1354 = vpop.permute.xlu0 %1353
        %1356 = vset.pattern.permute.xlu0 7
        %1357 = vperm.xlu0 %1356, %v446
        %v1358 = vpop.permute.xlu0 %1357
        %1360 = vset.pattern.permute.xlu0 7
        %1361 = vperm.xlu0 %1360, %v447
        %v1362 = vpop.permute.xlu0 %1361
        %1364 = vset.pattern.permute.xlu0 7
        %1365 = vperm.xlu0 %1364, %v448
        %v1366 = vpop.permute.xlu0 %1365
        %1368 = vset.pattern.permute.xlu0 7
        %1369 = vperm.xlu0 %1368, %v449
        %v1370 = vpop.permute.xlu0 %1369
        %1372 = vset.pattern.permute.xlu0 7
        %1373 = vperm.xlu0 %1372, %v450
        %v1374 = vpop.permute.xlu0 %1373
        %v1376 = vmul.f32 %v1340, %v1354
        %v1377 = vmul.f32 %v1341, %v1354
        %v1378 = vmul.f32 %v1342, %v1358
        %v1379 = vmul.f32 %v1343, %v1358
        %v1380 = vmul.f32 %v1344, %v1362
        %v1381 = vmul.f32 %v1345, %v1362
        %v1382 = vmul.f32 %v1346, %v1366
        %v1383 = vmul.f32 %v1347, %v1366
        %v1384 = vmul.f32 %v1348, %v1370
        %v1385 = vmul.f32 %v1349, %v1370
        %v1386 = vmul.f32 %v1350, %v1374
        %v1387 = vmul.f32 %v1351, %v1374
        %v1388 = vadd.f32 %v1260, %v1376
        %v1389 = vadd.f32 %v1261, %v1377
        %v1390 = vadd.f32 %v1262, %v1378
        %v1391 = vadd.f32 %v1263, %v1379
        %v1392 = vadd.f32 %v1264, %v1380
        %v1393 = vadd.f32 %v1265, %v1381
        %v1394 = vadd.f32 %v1266, %v1382
        %v1395 = vadd.f32 %v1267, %v1383
        %v1396 = vadd.f32 %v1268, %v1384
        %v1397 = vadd.f32 %v1269, %v1385
        %v1398 = vadd.f32 %v1270, %v1386
        %v1399 = vadd.f32 %v1271, %v1387
        %1400 = vrot.lane.b32.xlu0 %v433, 111
        %v1401 = vpop.permute.xlu0 %1400
        %1402 = vrot.lane.b32.xlu0 %v434, 111
        %v1403 = vpop.permute.xlu0 %1402
        %1404 = vrot.lane.b32.xlu0 %v435, 111
        %v1405 = vpop.permute.xlu0 %1404
        %1406 = vrot.lane.b32.xlu0 %v436, 111
        %v1407 = vpop.permute.xlu0 %1406
        %1408 = vrot.lane.b32.xlu0 %v437, 111
        %v1409 = vpop.permute.xlu0 %1408
        %1410 = vrot.lane.b32.xlu0 %v438, 111
        %v1411 = vpop.permute.xlu0 %1410
        %1412 = vrot.lane.b32.xlu0 %v439, 111
        %v1413 = vpop.permute.xlu0 %1412
        %1414 = vrot.lane.b32.xlu0 %v440, 111
        %v1415 = vpop.permute.xlu0 %1414
        %1416 = vrot.lane.b32.xlu0 %v441, 111
        %v1417 = vpop.permute.xlu0 %1416
        %1418 = vrot.lane.b32.xlu0 %v442, 111
        %v1419 = vpop.permute.xlu0 %1418
        %1420 = vrot.lane.b32.xlu0 %v443, 111
        %v1421 = vpop.permute.xlu0 %1420
        %1422 = vrot.lane.b32.xlu0 %v444, 111
        %v1423 = vpop.permute.xlu0 %1422
        %vm1424 = vcmask 908288
        %v1425 = vsel %vm1424, %v1401, %v1403
        %v1426 = vsel %vm1424, %v1405, %v1407
        %v1427 = vsel %vm1424, %v1409, %v1411
        %v1428 = vsel %vm1424, %v1413, %v1415
        %v1429 = vsel %vm1424, %v1417, %v1419
        %v1430 = vsel %vm1424, %v1421, %v1423
        %v1449 = vsel %vm1424, %v1403, %v1401
        %v1450 = vsel %vm1424, %v1407, %v1405
        %v1451 = vsel %vm1424, %v1411, %v1409
        %v1452 = vsel %vm1424, %v1415, %v1413
        %v1453 = vsel %vm1424, %v1419, %v1417
        %v1454 = vsel %vm1424, %v1423, %v1421
        %s1455 = scalar_lea.vmem %s4, 16
        %v1456 = vld [vmem:[%s1455] ss:$8 sm:$0x3]
        %v1458 = vlaneseq
        %v1459 = vshrl.u32 %v1458, 7
        %v1460 = vsub.s32 0, %v1459
        %v1461 = vrot.slane %v1456, %v1460
        %v1462 = vlaneseq
        %v1463 = vshrl.u32 %v1462, 7
        %v1464 = vsub.s32 1, %v1463
        %v1465 = vrot.slane %v1456, %v1464
        %v1468 = vmul.f32 %v1425, %v1461
        %v1469 = vmul.f32 %v1449, %v1465
        %v1470 = vmul.f32 %v1426, %v1461
        %v1471 = vmul.f32 %v1450, %v1465
        %v1472 = vmul.f32 %v1427, %v1461
        %v1473 = vmul.f32 %v1451, %v1465
        %v1474 = vmul.f32 %v1428, %v1461
        %v1475 = vmul.f32 %v1452, %v1465
        %v1476 = vmul.f32 %v1429, %v1461
        %v1477 = vmul.f32 %v1453, %v1465
        %v1478 = vmul.f32 %v1430, %v1461
        %v1479 = vmul.f32 %v1454, %v1465
        %1480 = vset.pattern.permute.xlu0 8
        %1481 = vperm.xlu0 %1480, %v445
        %v1482 = vpop.permute.xlu0 %1481
        %1484 = vset.pattern.permute.xlu0 8
        %1485 = vperm.xlu0 %1484, %v446
        %v1486 = vpop.permute.xlu0 %1485
        %1488 = vset.pattern.permute.xlu0 8
        %1489 = vperm.xlu0 %1488, %v447
        %v1490 = vpop.permute.xlu0 %1489
        %1492 = vset.pattern.permute.xlu0 8
        %1493 = vperm.xlu0 %1492, %v448
        %v1494 = vpop.permute.xlu0 %1493
        %1496 = vset.pattern.permute.xlu0 8
        %1497 = vperm.xlu0 %1496, %v449
        %v1498 = vpop.permute.xlu0 %1497
        %1500 = vset.pattern.permute.xlu0 8
        %1501 = vperm.xlu0 %1500, %v450
        %v1502 = vpop.permute.xlu0 %1501
        %v1504 = vmul.f32 %v1468, %v1482
        %v1505 = vmul.f32 %v1469, %v1482
        %v1506 = vmul.f32 %v1470, %v1486
        %v1507 = vmul.f32 %v1471, %v1486
        %v1508 = vmul.f32 %v1472, %v1490
        %v1509 = vmul.f32 %v1473, %v1490
        %v1510 = vmul.f32 %v1474, %v1494
        %v1511 = vmul.f32 %v1475, %v1494
        %v1512 = vmul.f32 %v1476, %v1498
        %v1513 = vmul.f32 %v1477, %v1498
        %v1514 = vmul.f32 %v1478, %v1502
        %v1515 = vmul.f32 %v1479, %v1502
        %v1516 = vadd.f32 %v1388, %v1504
        %v1517 = vadd.f32 %v1389, %v1505
        %v1518 = vadd.f32 %v1390, %v1506
        %v1519 = vadd.f32 %v1391, %v1507
        %v1520 = vadd.f32 %v1392, %v1508
        %v1521 = vadd.f32 %v1393, %v1509
        %v1522 = vadd.f32 %v1394, %v1510
        %v1523 = vadd.f32 %v1395, %v1511
        %v1524 = vadd.f32 %v1396, %v1512
        %v1525 = vadd.f32 %v1397, %v1513
        %v1526 = vadd.f32 %v1398, %v1514
        %v1527 = vadd.f32 %v1399, %v1515
        %1528 = vset.pattern.permute.xlu0 1
        %1529 = vperm.xlu0 %1528, %v285
        %v1530 = vpop.permute.xlu0 %1529
        %1532 = vset.pattern.permute.xlu0 1
        %1533 = vperm.xlu0 %1532, %v286
        %v1534 = vpop.permute.xlu0 %1533
        %1536 = vset.pattern.permute.xlu0 1
        %1537 = vperm.xlu0 %1536, %v287
        %v1538 = vpop.permute.xlu0 %1537
        %1540 = vset.pattern.permute.xlu0 1
        %1541 = vperm.xlu0 %1540, %v288
        %v1542 = vpop.permute.xlu0 %1541
        %1544 = vset.pattern.permute.xlu0 1
        %1545 = vperm.xlu0 %1544, %v289
        %v1546 = vpop.permute.xlu0 %1545
        %1548 = vset.pattern.permute.xlu0 1
        %1549 = vperm.xlu0 %1548, %v290
        %v1550 = vpop.permute.xlu0 %1549
        %v1552 = vadd.f32 %v1516, %v1530
        %v1553 = vadd.f32 %v1517, %v1530
        %v1554 = vadd.f32 %v1518, %v1534
        %v1555 = vadd.f32 %v1519, %v1534
        %v1556 = vadd.f32 %v1520, %v1538
        %v1557 = vadd.f32 %v1521, %v1538
        %v1558 = vadd.f32 %v1522, %v1542
        %v1559 = vadd.f32 %v1523, %v1542
        %v1560 = vadd.f32 %v1524, %v1546
        %v1561 = vadd.f32 %v1525, %v1546
        %v1562 = vadd.f32 %v1526, %v1550
        %v1563 = vadd.f32 %v1527, %v1550
        %v1564 = vmax.f32 %v1552, 0.0
        %v1565 = vmax.f32 %v1553, 0.0
        %v1566 = vmax.f32 %v1554, 0.0
        %v1567 = vmax.f32 %v1555, 0.0
        %v1568 = vmax.f32 %v1556, 0.0
        %v1569 = vmax.f32 %v1557, 0.0
        %v1570 = vmax.f32 %v1558, 0.0
        %v1571 = vmax.f32 %v1559, 0.0
        %v1572 = vmax.f32 %v1560, 0.0
        %v1573 = vmax.f32 %v1561, 0.0
        %v1574 = vmax.f32 %v1562, 0.0
        %v1575 = vmax.f32 %v1563, 0.0
        %v1576 = vmin.f32 %v1564, 6.0
        %v1577 = vmin.f32 %v1565, 6.0
        %v1578 = vmin.f32 %v1566, 6.0
        %v1579 = vmin.f32 %v1567, 6.0
        %v1580 = vmin.f32 %v1568, 6.0
        %v1581 = vmin.f32 %v1569, 6.0
        %v1582 = vmin.f32 %v1570, 6.0
        %v1583 = vmin.f32 %v1571, 6.0
        %v1584 = vmin.f32 %v1572, 6.0
        %v1585 = vmin.f32 %v1573, 6.0
        %v1586 = vmin.f32 %v1574, 6.0
        %v1587 = vmin.f32 %v1575, 6.0
        %v1588 = vld [vmem:[%s5] sm:$0xf]
        %v1589 = vpack.c.bf16 %v1578, %v1576
        %v1590 = vpack.c.bf16 %v1579, %v1577
        %v1591 = vpack.c.bf16 %v1582, %v1580
        %v1592 = vpack.c.bf16 %v1583, %v1581
        %v1593 = vpack.c.bf16 %v1586, %v1584
        %v1594 = vpack.c.bf16 %v1587, %v1585
        %v1595 = vld [vmem:[%s6] sm:$0xff]
        %1597 = vset.pattern.permute.xlu0 0
        %1598 = vperm.xlu0 %1597, %v1595
        %v1599 = vpop.permute.xlu0 %1598
        %vm1601 = vcmask 392192
        %v1603 = vsel %vm1601, %v1588, 0
        %1605 = vmatprep.subr.bf16.mxu0 0
        %1606 = vmatpush1.bf16.msra.mxu0 0
        %1607 = vmatprep.subr.bf16.mxu0 0
        %1608 = vmatpush1.bf16.msra.mxu0 0
        %1609 = vmatprep.subr.bf16.mxu0 0
        %1610 = vmatpush1.bf16.msra.mxu0 0
        %1611 = vmatprep.subr.bf16.mxu0 0
        %1612 = vmatpush1.bf16.msra.mxu0 0
        %1613 = vmatprep.subr.bf16.mxu0 0
        %1614 = vmatpush1.bf16.msra.mxu0 0
        %1615 = vmatprep.subr.bf16.mxu0 %v1594
        %1616 = vmatpush1.bf16.msra.mxu0 %v1593
        %1617 = vmatprep.subr.bf16.mxu0 %v1592
        %1618 = vmatpush1.bf16.msra.mxu0 %v1591
        %1619 = vmatprep.subr.bf16.mxu0 %v1590
        %1620 = vmatpush1.bf16.msra.mxu0 %v1589
        %1621 = vmatprep.subr.bf16.mxu0 0
        %1622 = vmatpush2.bf16.msra.mxu0 0
        %1623 = vmatprep.subr.bf16.mxu0 0
        %1624 = vmatpush2.bf16.msra.mxu0 0
        %1625 = vmatprep.subr.bf16.mxu0 0
        %1626 = vmatpush2.bf16.msra.mxu0 0
        %1627 = vmatprep.subr.bf16.mxu0 0
        %1628 = vmatpush2.bf16.msra.mxu0 0
        %1629 = vmatprep.subr.bf16.mxu0 0
        %1630 = vmatpush2.bf16.msra.mxu0 0
        %1631 = vmatprep.subr.bf16.mxu0 0
        %1632 = vmatpush2.bf16.msra.mxu0 0
        %1633 = vmatprep.subr.bf16.mxu0 0
        %1634 = vmatpush2.bf16.msra.mxu0 0
        %1635 = vmatprep.subr.bf16.mxu0 0
        %1636 = vmatpush2.bf16.msra.mxu0 0
        %1637 = vmatprep.mubr.bf16.mxu0 0
        %1638 = vmatmul.mubr.bf16.gmra.mxu0 %v1603
        %v1639 = vpop.f32.mrf.mxu0
        %v1640 = vadd.f32 %v1599, %v1639
        %v1641 = vpop.f32.mrf.mxu0
        %v1642 = vadd.f32 %v1599, %v1641
        %v1643 = vpop.f32.mrf.mxu0
        %v1644 = vpop.f32.mrf.mxu0
        %1645 = vdwg.mxu0
        %v1646 = vunpack.c.l.bf16 %v278
        %v1647 = vunpack.c.h.bf16 %v278
        %v1648 = vadd.f32 %v1640, %v1646
        %v1649 = vadd.f32 %v1642, %v1647
        %1650 = vst [vmem:[%s271] sm:$0xff] %v1648
        %1651 = vst [vmem:[%s271 + $0x8] sm:$0xff] %v1649
        %s1652 = sand.u32 %s181, 1
        %s1653 = scalar_lea.sflag [#allocation3], %s1652
        %s1654 = sand.u32 %s181, 1
        %s1655 = smul.addr %s1654, 16
        %s1656 = scalar_lea.vmem [#allocation2], %s1655
        // Predicated region
        $region49: #{tpu_custom_call.1} parent=47 // pred_check
          %p1657 = pneg %p191
        $region50: #{tpu_custom_call.1} parent=47 // pred_check_branch
          %1659 = sbr.rel (%p1657) target = $region52
        $region51: #{tpu_custom_call.1} parent=47 // pred_region
          %s1661 = ssub.s32 256, 256
          %1662 = vsyncadd %s1653, %s1661
          %s1663 = smul.addr %s21, 2
          %s1664 = smul.addr %s1663, 128
          %s1665 = scalar_lea.hbm %s7, %s1664
          %s1667 = sshll.u32 %s1656, 4
          %s1668 = int_to_ptr.vmem [resolvable:$true] %s1667
          %1670 = dma.vmem_to_hbm [thread:$0]  %s1668, 256, %s1665, %s1653
        $region52: #{tpu_custom_call.1} parent=47 // pred_fallthru
          _
      $region48: #{tpu_custom_call.1} parent=5 // pred_fallthru
        _
      %p1671 = scmp.le.s32.totalorder 2, %s16
      // Predicated region
      $region53: #{tpu_custom_call.1} parent=5 // pred_check
        %p1672 = pneg %p1671
      $region54: #{tpu_custom_call.1} parent=5 // pred_check_branch
        %1674 = sbr.rel (%p1672) target = $region56
      $region55: #{tpu_custom_call.1} parent=5 // pred_region
        %s1675 = ssub.s32 %s16, 2
        // Predicated region
        $region57: #{tpu_custom_call.1} parent=55 // pred_check
          %p1676 = pneg %p197
        $region58: #{tpu_custom_call.1} parent=55 // pred_check_branch
          %1678 = sbr.rel (%p1676) target = $region60
        $region59: #{tpu_custom_call.1} parent=55 // pred_region
          %s1679 = sand.u32 %s182, 1
          %s1680 = scalar_lea.sflag [#allocation3], %s1679
          %s1681 = sand.u32 %s182, 1
          %s1682 = smul.addr %s1681, 16
          %s1683 = scalar_lea.vmem [#allocation2], %s1682
          %1684 = dma.done %s1680, 256
        $region60: #{tpu_custom_call.1} parent=55 // pred_fallthru
          _
      $region56: #{tpu_custom_call.1} parent=5 // pred_fallthru
        _
    $region6: #{tpu_custom_call.1} parent=1 // loop_footer
      %s20 = sadd.s32 1, %s16
    $region7: #{tpu_custom_call.1} parent=1 // loop_footer_branch
      %15 = sbr.rel target = $region3
    $region8: #{tpu_custom_call.1} parent=1 // loop_exit
      _
    %1685 = vsyncpa [#allocation3], 1
    %s1686 = scalar_lea.sflag [#allocation3], 1
    %1687 = vsyncpa %s1686, 1

</llo_original>
